<compile_context>
chip_gen: v7x
topology: tpu7x:2x2x1
jax: 0.10.0
libtpu: 0.0.40
codegen_flags: <defaults>
</compile_context>

<pallas_src>
import functools

import jax
import jax.numpy as jnp
from jax import lax
from jax.experimental import pallas as pl
from jax.experimental.pallas import tpu as pltpu


VMEM_SPEC = pl.BlockSpec(memory_space=pltpu.MemorySpace.VMEM)


# ----------------------------------------------------------------------------
# GRU layer kernel (both directions, whole sequence, one invocation).
# PyTorch GRU cell semantics (gate order r, z, n):
#   r = sigmoid(x W_ir + b_ir + h W_hr + b_hr)
#   z = sigmoid(x W_iz + b_iz + h W_hz + b_hz)
#   n = tanh   (x W_in + b_in + r * (h W_hn + b_hn))
#   h' = (1 - z) * n + z * h
# Layout: x is time-major flat (T*B, F); gates fused on the lane axis (3H).
# ----------------------------------------------------------------------------
def gru_layer_kernel(x_ref, wi_ref, wh_ref, bi_ref, bh_ref, out_ref,
                     gi_scr, out_scr, *, seq_len, batch, hidden, num_dirs):
    T, B, H = seq_len, batch, hidden

    # Hoisted input projection: one big MXU matmul per direction (bias folded in).
    x = x_ref[...].astype(jnp.bfloat16)                              # (T*B, F)
    for d in range(num_dirs):
        gi = jnp.dot(x, wi_ref[d], preferred_element_type=jnp.float32)
        gi_scr[d] = gi + bi_ref[d]                                   # (T*B, 3H) f32

    def cell(gi_t, h_prev, d):
        # Single fused recurrent matmul: (B, H) x (H, 3H), bf16 operands, f32 acc.
        gh = jnp.dot(h_prev.astype(jnp.bfloat16), wh_ref[d],
                     preferred_element_type=jnp.float32) + bh_ref[d]
        r = jax.nn.sigmoid(gi_t[:, 0:H] + gh[:, 0:H])
        z = jax.nn.sigmoid(gi_t[:, H:2 * H] + gh[:, H:2 * H])
        n = jnp.tanh(gi_t[:, 2 * H:3 * H] + r * gh[:, 2 * H:3 * H])
        return (1.0 - z) * n + z * h_prev                            # f32 (B, H)

    def step(t, hs):
        new_hs = []
        for d in range(num_dirs):
            tt = t if d == 0 else (T - 1 - t)        # reverse direction walks backward
            row = tt * B
            gi_t = gi_scr[d, pl.ds(row, B), :]
            h_new = cell(gi_t, hs[d], d)
            out_scr[d, pl.ds(row, B), :] = h_new
            new_hs.append(h_new)
        return tuple(new_hs)

    init = tuple(jnp.zeros((B, H), jnp.float32) for _ in range(num_dirs))
    lax.fori_loop(0, T, step, init, unroll=(T <= 16))

    # Lane-concatenate the directions once, in VMEM (forward half then reverse
    # half), so no HBM concatenate is needed between layers.
    if num_dirs == 2:
        out_ref[...] = jnp.concatenate([out_scr[0], out_scr[1]], axis=-1)
    else:
        out_ref[...] = out_scr[0]


def gru_layer(x_flat, wi, wh, bi, bh, *, seq_len, batch, hidden, num_dirs):
    """One (bi)directional GRU layer. x_flat: (T*B, F_in) time-major flat."""
    TB = seq_len * batch
    kernel = functools.partial(gru_layer_kernel, seq_len=seq_len, batch=batch,
                               hidden=hidden, num_dirs=num_dirs)
    return pl.pallas_call(
        kernel,
        out_shape=jax.ShapeDtypeStruct((TB, num_dirs * hidden), jnp.float32),
        in_specs=[VMEM_SPEC] * 5,
        out_specs=VMEM_SPEC,
        scratch_shapes=[
            pltpu.VMEM((num_dirs, TB, 3 * hidden), jnp.float32),   # precomputed gi
            pltpu.VMEM((num_dirs, TB, hidden), jnp.float32),       # per-dir outputs
        ],
    )(x_flat, wi, wh, bi, bh)


# ----------------------------------------------------------------------------
# Head kernel: dense (no activation) + max softmax prob + argmax.
# max/argmax are computed from the logits (exp is monotone); the full (B, V)
# probability matrix is never materialized in HBM.
# ----------------------------------------------------------------------------
def head_kernel(x_ref, w_ref, b_ref, logits_ref, maxp_ref, idx_ref):
    x = x_ref[...].astype(jnp.bfloat16)                               # (B, D)
    logits = jnp.dot(x, w_ref[...], preferred_element_type=jnp.float32) + b_ref[...]
    logits_ref[...] = logits

    m = jnp.max(logits, axis=1, keepdims=True)
    denom = jnp.sum(jnp.exp(logits - m), axis=1, keepdims=True)
    maxp_ref[...] = 1.0 / denom          # max softmax prob = exp(0) / sum(exp(l - m))

    V = logits.shape[1]
    ids = lax.broadcasted_iota(jnp.int32, logits.shape, 1)
    # first index attaining the max (matches torch.max tie-breaking convention)
    idx_ref[...] = jnp.min(jnp.where(logits == m, ids, V), axis=1, keepdims=True)


def dense_softmax_argmax(x, w, b):
    B, _ = x.shape
    V = w.shape[1]
    logits, maxp, idx = pl.pallas_call(
        head_kernel,
        out_shape=(
            jax.ShapeDtypeStruct((B, V), jnp.float32),
            jax.ShapeDtypeStruct((B, 1), jnp.float32),
            jax.ShapeDtypeStruct((B, 1), jnp.int32),
        ),
        in_specs=[VMEM_SPEC] * 3,
        out_specs=(VMEM_SPEC, VMEM_SPEC, VMEM_SPEC),
    )(x, w, b.reshape(1, V))
    return logits, maxp[:, 0], idx[:, 0]


# ----------------------------------------------------------------------------
# OperationBase equivalent (eval mode).
# ----------------------------------------------------------------------------
class OperationBasePallas:
    def __init__(self, hidden_dim, num_layers, bidirectional, vocab_size,
                 embedding_dim, key):
        self.hidden_dim = hidden_dim
        self.num_layers = num_layers
        self.bidirectional = bidirectional
        self.vocab_size = vocab_size
        self.embedding_dim = embedding_dim
        self.num_dirs = 2 if bidirectional else 1
        nd = self.num_dirs

        keys = iter(jax.random.split(key, 3 + num_layers * 4))

        # "pretrained" embedding table (deterministic synthetic)
        self.embedding = 0.1 * jax.random.normal(
            next(keys), (vocab_size, embedding_dim), jnp.float32)

        # GRU params, gates fused on the lane axis in order [r | z | n]:
        # wi: (nd, F_in, 3H) bf16, wh: (nd, H, 3H) bf16, bi/bh: (nd, 1, 3H) f32
        self.gru_params = []
        for layer in range(num_layers):
            f_in = embedding_dim if layer == 0 else hidden_dim * nd
            wi = (0.1 * jax.random.normal(next(keys), (nd, f_in, 3 * hidden_dim),
                                          jnp.float32)).astype(jnp.bfloat16)
            wh = (0.1 * jax.random.normal(next(keys), (nd, hidden_dim, 3 * hidden_dim),
                                          jnp.float32)).astype(jnp.bfloat16)
            bi = 0.1 * jax.random.normal(next(keys), (nd, 1, 3 * hidden_dim), jnp.float32)
            bh = 0.1 * jax.random.normal(next(keys), (nd, 1, 3 * hidden_dim), jnp.float32)
            self.gru_params.append((wi, wh, bi, bh))

        d_out = hidden_dim * nd
        self.dense_w = (0.1 * jax.random.normal(next(keys), (d_out, vocab_size),
                                                jnp.float32)).astype(jnp.bfloat16)
        self.dense_b = 0.1 * jax.random.normal(next(keys), (vocab_size,), jnp.float32)

    def __call__(self, sentences, position, length=None):
        """sentences: (B, T) int32 token ids; position: (B,) int32; length unused."""
        assert sentences.shape[0] > 0
        B, T = sentences.shape

        # Embedding lookup straight into time-major flat layout (T*B, E):
        # row index = t*B + b, so no separate (B,T,E)->(T,B,E) transpose pass.
        ids_tm = sentences.T.reshape(-1)
        x = self.embedding[ids_tm]                            # (T*B, E) f32

        # Multi-layer (bi)directional GRU; init hidden = zeros (in-kernel).
        for (wi, wh, bi, bh) in self.gru_params:
            x = gru_layer(x, wi, wh, bi, bh, seq_len=T, batch=B,
                          hidden=self.hidden_dim, num_dirs=self.num_dirs)

        # Gather the requested timestep per batch row (tiny glue gather).
        rows = position.astype(jnp.int32) * B + jnp.arange(B, dtype=jnp.int32)
        output_position = x[rows]                             # (B, D)

        output_dense, decision_probs, decision_index = dense_softmax_argmax(
            output_position, self.dense_w, self.dense_b)
        # Matches torch forward return: (logits, max prob per row, argmax index).
        return output_dense, decision_probs, decision_index


if __name__ == "__main__":
    key = jax.random.PRNGKey(0)
    k_model, k_sent, k_pos = jax.random.split(key, 3)

    batch_size, seq_len = 2, 8
    vocab_size, embedding_dim = 64, 32
    hidden_dim, num_layers, bidirectional = 32, 2, True

    model = OperationBasePallas(hidden_dim, num_layers, bidirectional,
                                vocab_size, embedding_dim, k_model)

    sentences = jax.random.randint(k_sent, (batch_size, seq_len), 0, vocab_size, jnp.int32)
    position = jax.random.randint(k_pos, (batch_size,), 0, seq_len, jnp.int32)
    length = jnp.full((batch_size,), seq_len, jnp.int32)  # unused in base forward

    output_dense, decision_probs, decision_index = model(sentences, position, length)
    jax.block_until_ready((output_dense, decision_probs, decision_index))

    assert output_dense.shape == (batch_size, vocab_size)
    assert decision_probs.shape == (batch_size,)
    assert decision_index.shape == (batch_size,)
    print("KERNEL_OK")
</pallas_src>

<mosaic_0001>
module attributes {stable_mosaic.version = 11 : i64} {
  func.func @gru_layer_kernel(%arg0: memref<16x32xf32, #tpu.memory_space<vmem>>, %arg1: memref<2x32x96xbf16, #tpu.memory_space<vmem>>, %arg2: memref<2x32x96xbf16, #tpu.memory_space<vmem>>, %arg3: memref<2x1x96xf32, #tpu.memory_space<vmem>>, %arg4: memref<2x1x96xf32, #tpu.memory_space<vmem>>, %arg5: memref<16x64xf32, #tpu.memory_space<vmem>>, %arg6: memref<2x16x96xf32, #tpu.memory_space<vmem>>, %arg7: memref<2x16x32xf32, #tpu.memory_space<vmem>>) attributes {dimension_semantics = [], scalar_prefetch = 0 : i64, scratch_operands = 2 : i64, tpu.core_type = #tpu.core_type<tc>} {
    %c0 = arith.constant 0 : index
    %c0_0 = arith.constant 0 : index
    %0 = vector.load %arg0[%c0, %c0_0] : memref<16x32xf32, #tpu.memory_space<vmem>>, vector<16x32xf32>
    %1 = arith.truncf %0 : vector<16x32xf32> to vector<16x32xbf16>
    %c0_1 = arith.constant 0 : index
    %c0_2 = arith.constant 0 : index
    %c0_3 = arith.constant 0 : index
    %2 = vector.load %arg1[%c0_1, %c0_2, %c0_3] : memref<2x32x96xbf16, #tpu.memory_space<vmem>>, vector<1x32x96xbf16>
    %3 = vector.shape_cast %2 : vector<1x32x96xbf16> to vector<32x96xbf16>
    %cst = arith.constant dense<0.000000e+00> : vector<16x96xf32>
    %4 = tpu.matmul %1, %3, %cst {dimension_numbers = #tpu.dot_dimension_numbers<[1], [0], [0], [1], [0, 0, 1, 1], [], []>} : vector<16x32xbf16>, vector<32x96xbf16>, vector<16x96xf32> -> vector<16x96xf32>
    %c0_4 = arith.constant 0 : index
    %c0_5 = arith.constant 0 : index
    %c0_6 = arith.constant 0 : index
    %5 = vector.load %arg3[%c0_4, %c0_5, %c0_6] : memref<2x1x96xf32, #tpu.memory_space<vmem>>, vector<1x1x96xf32>
    %6 = vector.shape_cast %5 : vector<1x1x96xf32> to vector<1x96xf32>
    %7 = vector.broadcast %6 : vector<1x96xf32> to vector<16x96xf32>
    %8 = arith.addf %4, %7 : vector<16x96xf32>
    %c0_7 = arith.constant 0 : index
    %c0_8 = arith.constant 0 : index
    %c0_9 = arith.constant 0 : index
    %9 = vector.load %arg6[%c0_7, %c0_8, %c0_9] : memref<2x16x96xf32, #tpu.memory_space<vmem>>, vector<1x16x96xf32>
    %10 = vector.shape_cast %9 : vector<1x16x96xf32> to vector<16x96xf32>
    %11 = vector.shape_cast %8 : vector<16x96xf32> to vector<1x16x96xf32>
    tpu.vector_store %arg6[%c0_7, %c0_8, %c0_9], %11 {strides = array<i32>} : memref<2x16x96xf32, #tpu.memory_space<vmem>>, vector<1x16x96xf32>,
    %c1 = arith.constant 1 : index
    %c0_10 = arith.constant 0 : index
    %c0_11 = arith.constant 0 : index
    %12 = vector.load %arg1[%c1, %c0_10, %c0_11] : memref<2x32x96xbf16, #tpu.memory_space<vmem>>, vector<1x32x96xbf16>
    %13 = vector.shape_cast %12 : vector<1x32x96xbf16> to vector<32x96xbf16>
    %cst_12 = arith.constant dense<0.000000e+00> : vector<16x96xf32>
    %14 = tpu.matmul %1, %13, %cst_12 {dimension_numbers = #tpu.dot_dimension_numbers<[1], [0], [0], [1], [0, 0, 1, 1], [], []>} : vector<16x32xbf16>, vector<32x96xbf16>, vector<16x96xf32> -> vector<16x96xf32>
    %c1_13 = arith.constant 1 : index
    %c0_14 = arith.constant 0 : index
    %c0_15 = arith.constant 0 : index
    %15 = vector.load %arg3[%c1_13, %c0_14, %c0_15] : memref<2x1x96xf32, #tpu.memory_space<vmem>>, vector<1x1x96xf32>
    %16 = vector.shape_cast %15 : vector<1x1x96xf32> to vector<1x96xf32>
    %17 = vector.broadcast %16 : vector<1x96xf32> to vector<16x96xf32>
    %18 = arith.addf %14, %17 : vector<16x96xf32>
    %c1_16 = arith.constant 1 : index
    %c0_17 = arith.constant 0 : index
    %c0_18 = arith.constant 0 : index
    %19 = vector.load %arg6[%c1_16, %c0_17, %c0_18] : memref<2x16x96xf32, #tpu.memory_space<vmem>>, vector<1x16x96xf32>
    %20 = vector.shape_cast %19 : vector<1x16x96xf32> to vector<16x96xf32>
    %21 = vector.shape_cast %18 : vector<16x96xf32> to vector<1x16x96xf32>
    tpu.vector_store %arg6[%c1_16, %c0_17, %c0_18], %21 {strides = array<i32>} : memref<2x16x96xf32, #tpu.memory_space<vmem>>, vector<1x16x96xf32>,
    %cst_19 = arith.constant 0.000000e+00 : f32
    %22 = vector.broadcast %cst_19 : f32 to vector<2x32xf32>
    %cst_20 = arith.constant 0.000000e+00 : f32
    %23 = vector.broadcast %cst_20 : f32 to vector<2x32xf32>
    %c0_i32 = arith.constant 0 : i32
    %c2_i32 = arith.constant 2 : i32
    %24 = arith.muli %c0_i32, %c2_i32 : i32
    %c0_21 = arith.constant 0 : index
    %25 = arith.index_cast %24 : i32 to index
    %c0_22 = arith.constant 0 : index
    %26 = vector.load %arg6[%c0_21, %25, %c0_22] : memref<2x16x96xf32, #tpu.memory_space<vmem>>, vector<1x2x96xf32>
    %27 = vector.shape_cast %26 : vector<1x2x96xf32> to vector<2x96xf32>
    %28 = arith.truncf %22 : vector<2x32xf32> to vector<2x32xbf16>
    %c0_23 = arith.constant 0 : index
    %c0_24 = arith.constant 0 : index
    %c0_25 = arith.constant 0 : index
    %29 = vector.load %arg2[%c0_23, %c0_24, %c0_25] : memref<2x32x96xbf16, #tpu.memory_space<vmem>>, vector<1x32x96xbf16>
    %30 = vector.shape_cast %29 : vector<1x32x96xbf16> to vector<32x96xbf16>
    %cst_26 = arith.constant dense<0.000000e+00> : vector<2x96xf32>
    %31 = tpu.matmul %28, %30, %cst_26 {dimension_numbers = #tpu.dot_dimension_numbers<[1], [0], [0], [1], [0, 0, 1, 1], [], []>} : vector<2x32xbf16>, vector<32x96xbf16>, vector<2x96xf32> -> vector<2x96xf32>
    %c0_27 = arith.constant 0 : index
    %c0_28 = arith.constant 0 : index
    %c0_29 = arith.constant 0 : index
    %32 = vector.load %arg4[%c0_27, %c0_28, %c0_29] : memref<2x1x96xf32, #tpu.memory_space<vmem>>, vector<1x1x96xf32>
    %33 = vector.shape_cast %32 : vector<1x1x96xf32> to vector<1x96xf32>
    %34 = vector.broadcast %33 : vector<1x96xf32> to vector<2x96xf32>
    %35 = arith.addf %31, %34 : vector<2x96xf32>
    %36 = vector.extract_strided_slice %27 {offsets = [0, 0], sizes = [2, 32], strides = [1, 1]} : vector<2x96xf32> to vector<2x32xf32>
    %37 = vector.extract_strided_slice %35 {offsets = [0, 0], sizes = [2, 32], strides = [1, 1]} : vector<2x96xf32> to vector<2x32xf32>
    %38 = arith.addf %36, %37 : vector<2x32xf32>
    %39 = arith.negf %38 : vector<2x32xf32>
    %40 = math.exp %39 : vector<2x32xf32>
    %cst_30 = arith.constant 1.000000e+00 : f32
    %41 = vector.broadcast %cst_30 : f32 to vector<2x32xf32>
    %42 = arith.addf %41, %40 : vector<2x32xf32>
    %43 = arith.divf %41, %42 : vector<2x32xf32>
    %44 = vector.extract_strided_slice %27 {offsets = [0, 32], sizes = [2, 32], strides = [1, 1]} : vector<2x96xf32> to vector<2x32xf32>
    %45 = vector.extract_strided_slice %35 {offsets = [0, 32], sizes = [2, 32], strides = [1, 1]} : vector<2x96xf32> to vector<2x32xf32>
    %46 = arith.addf %44, %45 : vector<2x32xf32>
    %47 = arith.negf %46 : vector<2x32xf32>
    %48 = math.exp %47 : vector<2x32xf32>
    %cst_31 = arith.constant 1.000000e+00 : f32
    %49 = vector.broadcast %cst_31 : f32 to vector<2x32xf32>
    %50 = arith.addf %49, %48 : vector<2x32xf32>
    %51 = arith.divf %49, %50 : vector<2x32xf32>
    %52 = vector.extract_strided_slice %27 {offsets = [0, 64], sizes = [2, 32], strides = [1, 1]} : vector<2x96xf32> to vector<2x32xf32>
    %53 = vector.extract_strided_slice %35 {offsets = [0, 64], sizes = [2, 32], strides = [1, 1]} : vector<2x96xf32> to vector<2x32xf32>
    %54 = arith.mulf %43, %53 : vector<2x32xf32>
    %55 = arith.addf %52, %54 : vector<2x32xf32>
    %56 = math.tanh %55 : vector<2x32xf32>
    %cst_32 = arith.constant 1.000000e+00 : f32
    %57 = vector.broadcast %cst_32 : f32 to vector<2x32xf32>
    %58 = arith.subf %57, %51 : vector<2x32xf32>
    %59 = arith.mulf %58, %56 : vector<2x32xf32>
    %60 = arith.mulf %51, %22 : vector<2x32xf32>
    %61 = arith.addf %59, %60 : vector<2x32xf32>
    %c0_33 = arith.constant 0 : index
    %62 = arith.index_cast %24 : i32 to index
    %c0_34 = arith.constant 0 : index
    %63 = vector.load %arg7[%c0_33, %62, %c0_34] : memref<2x16x32xf32, #tpu.memory_space<vmem>>, vector<1x2x32xf32>
    %64 = vector.shape_cast %63 : vector<1x2x32xf32> to vector<2x32xf32>
    %65 = vector.shape_cast %61 : vector<2x32xf32> to vector<1x2x32xf32>
    tpu.vector_store %arg7[%c0_33, %62, %c0_34], %65 {strides = array<i32>} : memref<2x16x32xf32, #tpu.memory_space<vmem>>, vector<1x2x32xf32>,
    %c7_i32 = arith.constant 7 : i32
    %66 = arith.subi %c7_i32, %c0_i32 : i32
    %c2_i32_35 = arith.constant 2 : i32
    %67 = arith.muli %66, %c2_i32_35 : i32
    %c1_36 = arith.constant 1 : index
    %68 = arith.index_cast %67 : i32 to index
    %c0_37 = arith.constant 0 : index
    %69 = vector.load %arg6[%c1_36, %68, %c0_37] : memref<2x16x96xf32, #tpu.memory_space<vmem>>, vector<1x2x96xf32>
    %70 = vector.shape_cast %69 : vector<1x2x96xf32> to vector<2x96xf32>
    %71 = arith.truncf %23 : vector<2x32xf32> to vector<2x32xbf16>
    %c1_38 = arith.constant 1 : index
    %c0_39 = arith.constant 0 : index
    %c0_40 = arith.constant 0 : index
    %72 = vector.load %arg2[%c1_38, %c0_39, %c0_40] : memref<2x32x96xbf16, #tpu.memory_space<vmem>>, vector<1x32x96xbf16>
    %73 = vector.shape_cast %72 : vector<1x32x96xbf16> to vector<32x96xbf16>
    %cst_41 = arith.constant dense<0.000000e+00> : vector<2x96xf32>
    %74 = tpu.matmul %71, %73, %cst_41 {dimension_numbers = #tpu.dot_dimension_numbers<[1], [0], [0], [1], [0, 0, 1, 1], [], []>} : vector<2x32xbf16>, vector<32x96xbf16>, vector<2x96xf32> -> vector<2x96xf32>
    %c1_42 = arith.constant 1 : index
    %c0_43 = arith.constant 0 : index
    %c0_44 = arith.constant 0 : index
    %75 = vector.load %arg4[%c1_42, %c0_43, %c0_44] : memref<2x1x96xf32, #tpu.memory_space<vmem>>, vector<1x1x96xf32>
    %76 = vector.shape_cast %75 : vector<1x1x96xf32> to vector<1x96xf32>
    %77 = vector.broadcast %76 : vector<1x96xf32> to vector<2x96xf32>
    %78 = arith.addf %74, %77 : vector<2x96xf32>
    %79 = vector.extract_strided_slice %70 {offsets = [0, 0], sizes = [2, 32], strides = [1, 1]} : vector<2x96xf32> to vector<2x32xf32>
    %80 = vector.extract_strided_slice %78 {offsets = [0, 0], sizes = [2, 32], strides = [1, 1]} : vector<2x96xf32> to vector<2x32xf32>
    %81 = arith.addf %79, %80 : vector<2x32xf32>
    %82 = arith.negf %81 : vector<2x32xf32>
    %83 = math.exp %82 : vector<2x32xf32>
    %cst_45 = arith.constant 1.000000e+00 : f32
    %84 = vector.broadcast %cst_45 : f32 to vector<2x32xf32>
    %85 = arith.addf %84, %83 : vector<2x32xf32>
    %86 = arith.divf %84, %85 : vector<2x32xf32>
    %87 = vector.extract_strided_slice %70 {offsets = [0, 32], sizes = [2, 32], strides = [1, 1]} : vector<2x96xf32> to vector<2x32xf32>
    %88 = vector.extract_strided_slice %78 {offsets = [0, 32], sizes = [2, 32], strides = [1, 1]} : vector<2x96xf32> to vector<2x32xf32>
    %89 = arith.addf %87, %88 : vector<2x32xf32>
    %90 = arith.negf %89 : vector<2x32xf32>
    %91 = math.exp %90 : vector<2x32xf32>
    %cst_46 = arith.constant 1.000000e+00 : f32
    %92 = vector.broadcast %cst_46 : f32 to vector<2x32xf32>
    %93 = arith.addf %92, %91 : vector<2x32xf32>
    %94 = arith.divf %92, %93 : vector<2x32xf32>
    %95 = vector.extract_strided_slice %70 {offsets = [0, 64], sizes = [2, 32], strides = [1, 1]} : vector<2x96xf32> to vector<2x32xf32>
    %96 = vector.extract_strided_slice %78 {offsets = [0, 64], sizes = [2, 32], strides = [1, 1]} : vector<2x96xf32> to vector<2x32xf32>
    %97 = arith.mulf %86, %96 : vector<2x32xf32>
    %98 = arith.addf %95, %97 : vector<2x32xf32>
    %99 = math.tanh %98 : vector<2x32xf32>
    %cst_47 = arith.constant 1.000000e+00 : f32
    %100 = vector.broadcast %cst_47 : f32 to vector<2x32xf32>
    %101 = arith.subf %100, %94 : vector<2x32xf32>
    %102 = arith.mulf %101, %99 : vector<2x32xf32>
    %103 = arith.mulf %94, %23 : vector<2x32xf32>
    %104 = arith.addf %102, %103 : vector<2x32xf32>
    %c1_48 = arith.constant 1 : index
    %105 = arith.index_cast %67 : i32 to index
    %c0_49 = arith.constant 0 : index
    %106 = vector.load %arg7[%c1_48, %105, %c0_49] : memref<2x16x32xf32, #tpu.memory_space<vmem>>, vector<1x2x32xf32>
    %107 = vector.shape_cast %106 : vector<1x2x32xf32> to vector<2x32xf32>
    %108 = vector.shape_cast %104 : vector<2x32xf32> to vector<1x2x32xf32>
    tpu.vector_store %arg7[%c1_48, %105, %c0_49], %108 {strides = array<i32>} : memref<2x16x32xf32, #tpu.memory_space<vmem>>, vector<1x2x32xf32>,
    %c1_i32 = arith.constant 1 : i32
    %c2_i32_50 = arith.constant 2 : i32
    %109 = arith.muli %c1_i32, %c2_i32_50 : i32
    %c0_51 = arith.constant 0 : index
    %110 = arith.index_cast %109 : i32 to index
    %c0_52 = arith.constant 0 : index
    %111 = vector.load %arg6[%c0_51, %110, %c0_52] : memref<2x16x96xf32, #tpu.memory_space<vmem>>, vector<1x2x96xf32>
    %112 = vector.shape_cast %111 : vector<1x2x96xf32> to vector<2x96xf32>
    %113 = arith.truncf %61 : vector<2x32xf32> to vector<2x32xbf16>
    %c0_53 = arith.constant 0 : index
    %c0_54 = arith.constant 0 : index
    %c0_55 = arith.constant 0 : index
    %114 = vector.load %arg2[%c0_53, %c0_54, %c0_55] : memref<2x32x96xbf16, #tpu.memory_space<vmem>>, vector<1x32x96xbf16>
    %115 = vector.shape_cast %114 : vector<1x32x96xbf16> to vector<32x96xbf16>
    %cst_56 = arith.constant dense<0.000000e+00> : vector<2x96xf32>
    %116 = tpu.matmul %113, %115, %cst_56 {dimension_numbers = #tpu.dot_dimension_numbers<[1], [0], [0], [1], [0, 0, 1, 1], [], []>} : vector<2x32xbf16>, vector<32x96xbf16>, vector<2x96xf32> -> vector<2x96xf32>
    %c0_57 = arith.constant 0 : index
    %c0_58 = arith.constant 0 : index
    %c0_59 = arith.constant 0 : index
    %117 = vector.load %arg4[%c0_57, %c0_58, %c0_59] : memref<2x1x96xf32, #tpu.memory_space<vmem>>, vector<1x1x96xf32>
    %118 = vector.shape_cast %117 : vector<1x1x96xf32> to vector<1x96xf32>
    %119 = vector.broadcast %118 : vector<1x96xf32> to vector<2x96xf32>
    %120 = arith.addf %116, %119 : vector<2x96xf32>
    %121 = vector.extract_strided_slice %112 {offsets = [0, 0], sizes = [2, 32], strides = [1, 1]} : vector<2x96xf32> to vector<2x32xf32>
    %122 = vector.extract_strided_slice %120 {offsets = [0, 0], sizes = [2, 32], strides = [1, 1]} : vector<2x96xf32> to vector<2x32xf32>
    %123 = arith.addf %121, %122 : vector<2x32xf32>
    %124 = arith.negf %123 : vector<2x32xf32>
    %125 = math.exp %124 : vector<2x32xf32>
    %cst_60 = arith.constant 1.000000e+00 : f32
    %126 = vector.broadcast %cst_60 : f32 to vector<2x32xf32>
    %127 = arith.addf %126, %125 : vector<2x32xf32>
    %128 = arith.divf %126, %127 : vector<2x32xf32>
    %129 = vector.extract_strided_slice %112 {offsets = [0, 32], sizes = [2, 32], strides = [1, 1]} : vector<2x96xf32> to vector<2x32xf32>
    %130 = vector.extract_strided_slice %120 {offsets = [0, 32], sizes = [2, 32], strides = [1, 1]} : vector<2x96xf32> to vector<2x32xf32>
    %131 = arith.addf %129, %130 : vector<2x32xf32>
    %132 = arith.negf %131 : vector<2x32xf32>
    %133 = math.exp %132 : vector<2x32xf32>
    %cst_61 = arith.constant 1.000000e+00 : f32
    %134 = vector.broadcast %cst_61 : f32 to vector<2x32xf32>
    %135 = arith.addf %134, %133 : vector<2x32xf32>
    %136 = arith.divf %134, %135 : vector<2x32xf32>
    %137 = vector.extract_strided_slice %112 {offsets = [0, 64], sizes = [2, 32], strides = [1, 1]} : vector<2x96xf32> to vector<2x32xf32>
    %138 = vector.extract_strided_slice %120 {offsets = [0, 64], sizes = [2, 32], strides = [1, 1]} : vector<2x96xf32> to vector<2x32xf32>
    %139 = arith.mulf %128, %138 : vector<2x32xf32>
    %140 = arith.addf %137, %139 : vector<2x32xf32>
    %141 = math.tanh %140 : vector<2x32xf32>
    %cst_62 = arith.constant 1.000000e+00 : f32
    %142 = vector.broadcast %cst_62 : f32 to vector<2x32xf32>
    %143 = arith.subf %142, %136 : vector<2x32xf32>
    %144 = arith.mulf %143, %141 : vector<2x32xf32>
    %145 = arith.mulf %136, %61 : vector<2x32xf32>
    %146 = arith.addf %144, %145 : vector<2x32xf32>
    %c0_63 = arith.constant 0 : index
    %147 = arith.index_cast %109 : i32 to index
    %c0_64 = arith.constant 0 : index
    %148 = vector.load %arg7[%c0_63, %147, %c0_64] : memref<2x16x32xf32, #tpu.memory_space<vmem>>, vector<1x2x32xf32>
    %149 = vector.shape_cast %148 : vector<1x2x32xf32> to vector<2x32xf32>
    %150 = vector.shape_cast %146 : vector<2x32xf32> to vector<1x2x32xf32>
    tpu.vector_store %arg7[%c0_63, %147, %c0_64], %150 {strides = array<i32>} : memref<2x16x32xf32, #tpu.memory_space<vmem>>, vector<1x2x32xf32>,
    %c7_i32_65 = arith.constant 7 : i32
    %151 = arith.subi %c7_i32_65, %c1_i32 : i32
    %c2_i32_66 = arith.constant 2 : i32
    %152 = arith.muli %151, %c2_i32_66 : i32
    %c1_67 = arith.constant 1 : index
    %153 = arith.index_cast %152 : i32 to index
    %c0_68 = arith.constant 0 : index
    %154 = vector.load %arg6[%c1_67, %153, %c0_68] : memref<2x16x96xf32, #tpu.memory_space<vmem>>, vector<1x2x96xf32>
    %155 = vector.shape_cast %154 : vector<1x2x96xf32> to vector<2x96xf32>
    %156 = arith.truncf %104 : vector<2x32xf32> to vector<2x32xbf16>
    %c1_69 = arith.constant 1 : index
    %c0_70 = arith.constant 0 : index
    %c0_71 = arith.constant 0 : index
    %157 = vector.load %arg2[%c1_69, %c0_70, %c0_71] : memref<2x32x96xbf16, #tpu.memory_space<vmem>>, vector<1x32x96xbf16>
    %158 = vector.shape_cast %157 : vector<1x32x96xbf16> to vector<32x96xbf16>
    %cst_72 = arith.constant dense<0.000000e+00> : vector<2x96xf32>
    %159 = tpu.matmul %156, %158, %cst_72 {dimension_numbers = #tpu.dot_dimension_numbers<[1], [0], [0], [1], [0, 0, 1, 1], [], []>} : vector<2x32xbf16>, vector<32x96xbf16>, vector<2x96xf32> -> vector<2x96xf32>
    %c1_73 = arith.constant 1 : index
    %c0_74 = arith.constant 0 : index
    %c0_75 = arith.constant 0 : index
    %160 = vector.load %arg4[%c1_73, %c0_74, %c0_75] : memref<2x1x96xf32, #tpu.memory_space<vmem>>, vector<1x1x96xf32>
    %161 = vector.shape_cast %160 : vector<1x1x96xf32> to vector<1x96xf32>
    %162 = vector.broadcast %161 : vector<1x96xf32> to vector<2x96xf32>
    %163 = arith.addf %159, %162 : vector<2x96xf32>
    %164 = vector.extract_strided_slice %155 {offsets = [0, 0], sizes = [2, 32], strides = [1, 1]} : vector<2x96xf32> to vector<2x32xf32>
    %165 = vector.extract_strided_slice %163 {offsets = [0, 0], sizes = [2, 32], strides = [1, 1]} : vector<2x96xf32> to vector<2x32xf32>
    %166 = arith.addf %164, %165 : vector<2x32xf32>
    %167 = arith.negf %166 : vector<2x32xf32>
    %168 = math.exp %167 : vector<2x32xf32>
    %cst_76 = arith.constant 1.000000e+00 : f32
    %169 = vector.broadcast %cst_76 : f32 to vector<2x32xf32>
    %170 = arith.addf %169, %168 : vector<2x32xf32>
    %171 = arith.divf %169, %170 : vector<2x32xf32>
    %172 = vector.extract_strided_slice %155 {offsets = [0, 32], sizes = [2, 32], strides = [1, 1]} : vector<2x96xf32> to vector<2x32xf32>
    %173 = vector.extract_strided_slice %163 {offsets = [0, 32], sizes = [2, 32], strides = [1, 1]} : vector<2x96xf32> to vector<2x32xf32>
    %174 = arith.addf %172, %173 : vector<2x32xf32>
    %175 = arith.negf %174 : vector<2x32xf32>
    %176 = math.exp %175 : vector<2x32xf32>
    %cst_77 = arith.constant 1.000000e+00 : f32
    %177 = vector.broadcast %cst_77 : f32 to vector<2x32xf32>
    %178 = arith.addf %177, %176 : vector<2x32xf32>
    %179 = arith.divf %177, %178 : vector<2x32xf32>
    %180 = vector.extract_strided_slice %155 {offsets = [0, 64], sizes = [2, 32], strides = [1, 1]} : vector<2x96xf32> to vector<2x32xf32>
    %181 = vector.extract_strided_slice %163 {offsets = [0, 64], sizes = [2, 32], strides = [1, 1]} : vector<2x96xf32> to vector<2x32xf32>
    %182 = arith.mulf %171, %181 : vector<2x32xf32>
    %183 = arith.addf %180, %182 : vector<2x32xf32>
    %184 = math.tanh %183 : vector<2x32xf32>
    %cst_78 = arith.constant 1.000000e+00 : f32
    %185 = vector.broadcast %cst_78 : f32 to vector<2x32xf32>
    %186 = arith.subf %185, %179 : vector<2x32xf32>
    %187 = arith.mulf %186, %184 : vector<2x32xf32>
    %188 = arith.mulf %179, %104 : vector<2x32xf32>
    %189 = arith.addf %187, %188 : vector<2x32xf32>
    %c1_79 = arith.constant 1 : index
    %190 = arith.index_cast %152 : i32 to index
    %c0_80 = arith.constant 0 : index
    %191 = vector.load %arg7[%c1_79, %190, %c0_80] : memref<2x16x32xf32, #tpu.memory_space<vmem>>, vector<1x2x32xf32>
    %192 = vector.shape_cast %191 : vector<1x2x32xf32> to vector<2x32xf32>
    %193 = vector.shape_cast %189 : vector<2x32xf32> to vector<1x2x32xf32>
    tpu.vector_store %arg7[%c1_79, %190, %c0_80], %193 {strides = array<i32>} : memref<2x16x32xf32, #tpu.memory_space<vmem>>, vector<1x2x32xf32>,
    %c2_i32_81 = arith.constant 2 : i32
    %c2_i32_82 = arith.constant 2 : i32
    %194 = arith.muli %c2_i32_81, %c2_i32_82 : i32
    %c0_83 = arith.constant 0 : index
    %195 = arith.index_cast %194 : i32 to index
    %c0_84 = arith.constant 0 : index
    %196 = vector.load %arg6[%c0_83, %195, %c0_84] : memref<2x16x96xf32, #tpu.memory_space<vmem>>, vector<1x2x96xf32>
    %197 = vector.shape_cast %196 : vector<1x2x96xf32> to vector<2x96xf32>
    %198 = arith.truncf %146 : vector<2x32xf32> to vector<2x32xbf16>
    %c0_85 = arith.constant 0 : index
    %c0_86 = arith.constant 0 : index
    %c0_87 = arith.constant 0 : index
    %199 = vector.load %arg2[%c0_85, %c0_86, %c0_87] : memref<2x32x96xbf16, #tpu.memory_space<vmem>>, vector<1x32x96xbf16>
    %200 = vector.shape_cast %199 : vector<1x32x96xbf16> to vector<32x96xbf16>
    %cst_88 = arith.constant dense<0.000000e+00> : vector<2x96xf32>
    %201 = tpu.matmul %198, %200, %cst_88 {dimension_numbers = #tpu.dot_dimension_numbers<[1], [0], [0], [1], [0, 0, 1, 1], [], []>} : vector<2x32xbf16>, vector<32x96xbf16>, vector<2x96xf32> -> vector<2x96xf32>
    %c0_89 = arith.constant 0 : index
    %c0_90 = arith.constant 0 : index
    %c0_91 = arith.constant 0 : index
    %202 = vector.load %arg4[%c0_89, %c0_90, %c0_91] : memref<2x1x96xf32, #tpu.memory_space<vmem>>, vector<1x1x96xf32>
    %203 = vector.shape_cast %202 : vector<1x1x96xf32> to vector<1x96xf32>
    %204 = vector.broadcast %203 : vector<1x96xf32> to vector<2x96xf32>
    %205 = arith.addf %201, %204 : vector<2x96xf32>
    %206 = vector.extract_strided_slice %197 {offsets = [0, 0], sizes = [2, 32], strides = [1, 1]} : vector<2x96xf32> to vector<2x32xf32>
    %207 = vector.extract_strided_slice %205 {offsets = [0, 0], sizes = [2, 32], strides = [1, 1]} : vector<2x96xf32> to vector<2x32xf32>
    %208 = arith.addf %206, %207 : vector<2x32xf32>
    %209 = arith.negf %208 : vector<2x32xf32>
    %210 = math.exp %209 : vector<2x32xf32>
    %cst_92 = arith.constant 1.000000e+00 : f32
    %211 = vector.broadcast %cst_92 : f32 to vector<2x32xf32>
    %212 = arith.addf %211, %210 : vector<2x32xf32>
    %213 = arith.divf %211, %212 : vector<2x32xf32>
    %214 = vector.extract_strided_slice %197 {offsets = [0, 32], sizes = [2, 32], strides = [1, 1]} : vector<2x96xf32> to vector<2x32xf32>
    %215 = vector.extract_strided_slice %205 {offsets = [0, 32], sizes = [2, 32], strides = [1, 1]} : vector<2x96xf32> to vector<2x32xf32>
    %216 = arith.addf %214, %215 : vector<2x32xf32>
    %217 = arith.negf %216 : vector<2x32xf32>
    %218 = math.exp %217 : vector<2x32xf32>
    %cst_93 = arith.constant 1.000000e+00 : f32
    %219 = vector.broadcast %cst_93 : f32 to vector<2x32xf32>
    %220 = arith.addf %219, %218 : vector<2x32xf32>
    %221 = arith.divf %219, %220 : vector<2x32xf32>
    %222 = vector.extract_strided_slice %197 {offsets = [0, 64], sizes = [2, 32], strides = [1, 1]} : vector<2x96xf32> to vector<2x32xf32>
    %223 = vector.extract_strided_slice %205 {offsets = [0, 64], sizes = [2, 32], strides = [1, 1]} : vector<2x96xf32> to vector<2x32xf32>
    %224 = arith.mulf %213, %223 : vector<2x32xf32>
    %225 = arith.addf %222, %224 : vector<2x32xf32>
    %226 = math.tanh %225 : vector<2x32xf32>
    %cst_94 = arith.constant 1.000000e+00 : f32
    %227 = vector.broadcast %cst_94 : f32 to vector<2x32xf32>
    %228 = arith.subf %227, %221 : vector<2x32xf32>
    %229 = arith.mulf %228, %226 : vector<2x32xf32>
    %230 = arith.mulf %221, %146 : vector<2x32xf32>
    %231 = arith.addf %229, %230 : vector<2x32xf32>
    %c0_95 = arith.constant 0 : index
    %232 = arith.index_cast %194 : i32 to index
    %c0_96 = arith.constant 0 : index
    %233 = vector.load %arg7[%c0_95, %232, %c0_96] : memref<2x16x32xf32, #tpu.memory_space<vmem>>, vector<1x2x32xf32>
    %234 = vector.shape_cast %233 : vector<1x2x32xf32> to vector<2x32xf32>
    %235 = vector.shape_cast %231 : vector<2x32xf32> to vector<1x2x32xf32>
    tpu.vector_store %arg7[%c0_95, %232, %c0_96], %235 {strides = array<i32>} : memref<2x16x32xf32, #tpu.memory_space<vmem>>, vector<1x2x32xf32>,
    %c7_i32_97 = arith.constant 7 : i32
    %236 = arith.subi %c7_i32_97, %c2_i32_81 : i32
    %c2_i32_98 = arith.constant 2 : i32
    %237 = arith.muli %236, %c2_i32_98 : i32
    %c1_99 = arith.constant 1 : index
    %238 = arith.index_cast %237 : i32 to index
    %c0_100 = arith.constant 0 : index
    %239 = vector.load %arg6[%c1_99, %238, %c0_100] : memref<2x16x96xf32, #tpu.memory_space<vmem>>, vector<1x2x96xf32>
    %240 = vector.shape_cast %239 : vector<1x2x96xf32> to vector<2x96xf32>
    %241 = arith.truncf %189 : vector<2x32xf32> to vector<2x32xbf16>
    %c1_101 = arith.constant 1 : index
    %c0_102 = arith.constant 0 : index
    %c0_103 = arith.constant 0 : index
    %242 = vector.load %arg2[%c1_101, %c0_102, %c0_103] : memref<2x32x96xbf16, #tpu.memory_space<vmem>>, vector<1x32x96xbf16>
    %243 = vector.shape_cast %242 : vector<1x32x96xbf16> to vector<32x96xbf16>
    %cst_104 = arith.constant dense<0.000000e+00> : vector<2x96xf32>
    %244 = tpu.matmul %241, %243, %cst_104 {dimension_numbers = #tpu.dot_dimension_numbers<[1], [0], [0], [1], [0, 0, 1, 1], [], []>} : vector<2x32xbf16>, vector<32x96xbf16>, vector<2x96xf32> -> vector<2x96xf32>
    %c1_105 = arith.constant 1 : index
    %c0_106 = arith.constant 0 : index
    %c0_107 = arith.constant 0 : index
    %245 = vector.load %arg4[%c1_105, %c0_106, %c0_107] : memref<2x1x96xf32, #tpu.memory_space<vmem>>, vector<1x1x96xf32>
    %246 = vector.shape_cast %245 : vector<1x1x96xf32> to vector<1x96xf32>
    %247 = vector.broadcast %246 : vector<1x96xf32> to vector<2x96xf32>
    %248 = arith.addf %244, %247 : vector<2x96xf32>
    %249 = vector.extract_strided_slice %240 {offsets = [0, 0], sizes = [2, 32], strides = [1, 1]} : vector<2x96xf32> to vector<2x32xf32>
    %250 = vector.extract_strided_slice %248 {offsets = [0, 0], sizes = [2, 32], strides = [1, 1]} : vector<2x96xf32> to vector<2x32xf32>
    %251 = arith.addf %249, %250 : vector<2x32xf32>
    %252 = arith.negf %251 : vector<2x32xf32>
    %253 = math.exp %252 : vector<2x32xf32>
    %cst_108 = arith.constant 1.000000e+00 : f32
    %254 = vector.broadcast %cst_108 : f32 to vector<2x32xf32>
    %255 = arith.addf %254, %253 : vector<2x32xf32>
    %256 = arith.divf %254, %255 : vector<2x32xf32>
    %257 = vector.extract_strided_slice %240 {offsets = [0, 32], sizes = [2, 32], strides = [1, 1]} : vector<2x96xf32> to vector<2x32xf32>
    %258 = vector.extract_strided_slice %248 {offsets = [0, 32], sizes = [2, 32], strides = [1, 1]} : vector<2x96xf32> to vector<2x32xf32>
    %259 = arith.addf %257, %258 : vector<2x32xf32>
    %260 = arith.negf %259 : vector<2x32xf32>
    %261 = math.exp %260 : vector<2x32xf32>
    %cst_109 = arith.constant 1.000000e+00 : f32
    %262 = vector.broadcast %cst_109 : f32 to vector<2x32xf32>
    %263 = arith.addf %262, %261 : vector<2x32xf32>
    %264 = arith.divf %262, %263 : vector<2x32xf32>
    %265 = vector.extract_strided_slice %240 {offsets = [0, 64], sizes = [2, 32], strides = [1, 1]} : vector<2x96xf32> to vector<2x32xf32>
    %266 = vector.extract_strided_slice %248 {offsets = [0, 64], sizes = [2, 32], strides = [1, 1]} : vector<2x96xf32> to vector<2x32xf32>
    %267 = arith.mulf %256, %266 : vector<2x32xf32>
    %268 = arith.addf %265, %267 : vector<2x32xf32>
    %269 = math.tanh %268 : vector<2x32xf32>
    %cst_110 = arith.constant 1.000000e+00 : f32
    %270 = vector.broadcast %cst_110 : f32 to vector<2x32xf32>
    %271 = arith.subf %270, %264 : vector<2x32xf32>
    %272 = arith.mulf %271, %269 : vector<2x32xf32>
    %273 = arith.mulf %264, %189 : vector<2x32xf32>
    %274 = arith.addf %272, %273 : vector<2x32xf32>
    %c1_111 = arith.constant 1 : index
    %275 = arith.index_cast %237 : i32 to index
    %c0_112 = arith.constant 0 : index
    %276 = vector.load %arg7[%c1_111, %275, %c0_112] : memref<2x16x32xf32, #tpu.memory_space<vmem>>, vector<1x2x32xf32>
    %277 = vector.shape_cast %276 : vector<1x2x32xf32> to vector<2x32xf32>
    %278 = vector.shape_cast %274 : vector<2x32xf32> to vector<1x2x32xf32>
    tpu.vector_store %arg7[%c1_111, %275, %c0_112], %278 {strides = array<i32>} : memref<2x16x32xf32, #tpu.memory_space<vmem>>, vector<1x2x32xf32>,
    %c3_i32 = arith.constant 3 : i32
    %c2_i32_113 = arith.constant 2 : i32
    %279 = arith.muli %c3_i32, %c2_i32_113 : i32
    %c0_114 = arith.constant 0 : index
    %280 = arith.index_cast %279 : i32 to index
    %c0_115 = arith.constant 0 : index
    %281 = vector.load %arg6[%c0_114, %280, %c0_115] : memref<2x16x96xf32, #tpu.memory_space<vmem>>, vector<1x2x96xf32>
    %282 = vector.shape_cast %281 : vector<1x2x96xf32> to vector<2x96xf32>
    %283 = arith.truncf %231 : vector<2x32xf32> to vector<2x32xbf16>
    %c0_116 = arith.constant 0 : index
    %c0_117 = arith.constant 0 : index
    %c0_118 = arith.constant 0 : index
    %284 = vector.load %arg2[%c0_116, %c0_117, %c0_118] : memref<2x32x96xbf16, #tpu.memory_space<vmem>>, vector<1x32x96xbf16>
    %285 = vector.shape_cast %284 : vector<1x32x96xbf16> to vector<32x96xbf16>
    %cst_119 = arith.constant dense<0.000000e+00> : vector<2x96xf32>
    %286 = tpu.matmul %283, %285, %cst_119 {dimension_numbers = #tpu.dot_dimension_numbers<[1], [0], [0], [1], [0, 0, 1, 1], [], []>} : vector<2x32xbf16>, vector<32x96xbf16>, vector<2x96xf32> -> vector<2x96xf32>
    %c0_120 = arith.constant 0 : index
    %c0_121 = arith.constant 0 : index
    %c0_122 = arith.constant 0 : index
    %287 = vector.load %arg4[%c0_120, %c0_121, %c0_122] : memref<2x1x96xf32, #tpu.memory_space<vmem>>, vector<1x1x96xf32>
    %288 = vector.shape_cast %287 : vector<1x1x96xf32> to vector<1x96xf32>
    %289 = vector.broadcast %288 : vector<1x96xf32> to vector<2x96xf32>
    %290 = arith.addf %286, %289 : vector<2x96xf32>
    %291 = vector.extract_strided_slice %282 {offsets = [0, 0], sizes = [2, 32], strides = [1, 1]} : vector<2x96xf32> to vector<2x32xf32>
    %292 = vector.extract_strided_slice %290 {offsets = [0, 0], sizes = [2, 32], strides = [1, 1]} : vector<2x96xf32> to vector<2x32xf32>
    %293 = arith.addf %291, %292 : vector<2x32xf32>
    %294 = arith.negf %293 : vector<2x32xf32>
    %295 = math.exp %294 : vector<2x32xf32>
    %cst_123 = arith.constant 1.000000e+00 : f32
    %296 = vector.broadcast %cst_123 : f32 to vector<2x32xf32>
    %297 = arith.addf %296, %295 : vector<2x32xf32>
    %298 = arith.divf %296, %297 : vector<2x32xf32>
    %299 = vector.extract_strided_slice %282 {offsets = [0, 32], sizes = [2, 32], strides = [1, 1]} : vector<2x96xf32> to vector<2x32xf32>
    %300 = vector.extract_strided_slice %290 {offsets = [0, 32], sizes = [2, 32], strides = [1, 1]} : vector<2x96xf32> to vector<2x32xf32>
    %301 = arith.addf %299, %300 : vector<2x32xf32>
    %302 = arith.negf %301 : vector<2x32xf32>
    %303 = math.exp %302 : vector<2x32xf32>
    %cst_124 = arith.constant 1.000000e+00 : f32
    %304 = vector.broadcast %cst_124 : f32 to vector<2x32xf32>
    %305 = arith.addf %304, %303 : vector<2x32xf32>
    %306 = arith.divf %304, %305 : vector<2x32xf32>
    %307 = vector.extract_strided_slice %282 {offsets = [0, 64], sizes = [2, 32], strides = [1, 1]} : vector<2x96xf32> to vector<2x32xf32>
    %308 = vector.extract_strided_slice %290 {offsets = [0, 64], sizes = [2, 32], strides = [1, 1]} : vector<2x96xf32> to vector<2x32xf32>
    %309 = arith.mulf %298, %308 : vector<2x32xf32>
    %310 = arith.addf %307, %309 : vector<2x32xf32>
    %311 = math.tanh %310 : vector<2x32xf32>
    %cst_125 = arith.constant 1.000000e+00 : f32
    %312 = vector.broadcast %cst_125 : f32 to vector<2x32xf32>
    %313 = arith.subf %312, %306 : vector<2x32xf32>
    %314 = arith.mulf %313, %311 : vector<2x32xf32>
    %315 = arith.mulf %306, %231 : vector<2x32xf32>
    %316 = arith.addf %314, %315 : vector<2x32xf32>
    %c0_126 = arith.constant 0 : index
    %317 = arith.index_cast %279 : i32 to index
    %c0_127 = arith.constant 0 : index
    %318 = vector.load %arg7[%c0_126, %317, %c0_127] : memref<2x16x32xf32, #tpu.memory_space<vmem>>, vector<1x2x32xf32>
    %319 = vector.shape_cast %318 : vector<1x2x32xf32> to vector<2x32xf32>
    %320 = vector.shape_cast %316 : vector<2x32xf32> to vector<1x2x32xf32>
    tpu.vector_store %arg7[%c0_126, %317, %c0_127], %320 {strides = array<i32>} : memref<2x16x32xf32, #tpu.memory_space<vmem>>, vector<1x2x32xf32>,
    %c7_i32_128 = arith.constant 7 : i32
    %321 = arith.subi %c7_i32_128, %c3_i32 : i32
    %c2_i32_129 = arith.constant 2 : i32
    %322 = arith.muli %321, %c2_i32_129 : i32
    %c1_130 = arith.constant 1 : index
    %323 = arith.index_cast %322 : i32 to index
    %c0_131 = arith.constant 0 : index
    %324 = vector.load %arg6[%c1_130, %323, %c0_131] : memref<2x16x96xf32, #tpu.memory_space<vmem>>, vector<1x2x96xf32>
    %325 = vector.shape_cast %324 : vector<1x2x96xf32> to vector<2x96xf32>
    %326 = arith.truncf %274 : vector<2x32xf32> to vector<2x32xbf16>
    %c1_132 = arith.constant 1 : index
    %c0_133 = arith.constant 0 : index
    %c0_134 = arith.constant 0 : index
    %327 = vector.load %arg2[%c1_132, %c0_133, %c0_134] : memref<2x32x96xbf16, #tpu.memory_space<vmem>>, vector<1x32x96xbf16>
    %328 = vector.shape_cast %327 : vector<1x32x96xbf16> to vector<32x96xbf16>
    %cst_135 = arith.constant dense<0.000000e+00> : vector<2x96xf32>
    %329 = tpu.matmul %326, %328, %cst_135 {dimension_numbers = #tpu.dot_dimension_numbers<[1], [0], [0], [1], [0, 0, 1, 1], [], []>} : vector<2x32xbf16>, vector<32x96xbf16>, vector<2x96xf32> -> vector<2x96xf32>
    %c1_136 = arith.constant 1 : index
    %c0_137 = arith.constant 0 : index
    %c0_138 = arith.constant 0 : index
    %330 = vector.load %arg4[%c1_136, %c0_137, %c0_138] : memref<2x1x96xf32, #tpu.memory_space<vmem>>, vector<1x1x96xf32>
    %331 = vector.shape_cast %330 : vector<1x1x96xf32> to vector<1x96xf32>
    %332 = vector.broadcast %331 : vector<1x96xf32> to vector<2x96xf32>
    %333 = arith.addf %329, %332 : vector<2x96xf32>
    %334 = vector.extract_strided_slice %325 {offsets = [0, 0], sizes = [2, 32], strides = [1, 1]} : vector<2x96xf32> to vector<2x32xf32>
    %335 = vector.extract_strided_slice %333 {offsets = [0, 0], sizes = [2, 32], strides = [1, 1]} : vector<2x96xf32> to vector<2x32xf32>
    %336 = arith.addf %334, %335 : vector<2x32xf32>
    %337 = arith.negf %336 : vector<2x32xf32>
    %338 = math.exp %337 : vector<2x32xf32>
    %cst_139 = arith.constant 1.000000e+00 : f32
    %339 = vector.broadcast %cst_139 : f32 to vector<2x32xf32>
    %340 = arith.addf %339, %338 : vector<2x32xf32>
    %341 = arith.divf %339, %340 : vector<2x32xf32>
    %342 = vector.extract_strided_slice %325 {offsets = [0, 32], sizes = [2, 32], strides = [1, 1]} : vector<2x96xf32> to vector<2x32xf32>
    %343 = vector.extract_strided_slice %333 {offsets = [0, 32], sizes = [2, 32], strides = [1, 1]} : vector<2x96xf32> to vector<2x32xf32>
    %344 = arith.addf %342, %343 : vector<2x32xf32>
    %345 = arith.negf %344 : vector<2x32xf32>
    %346 = math.exp %345 : vector<2x32xf32>
    %cst_140 = arith.constant 1.000000e+00 : f32
    %347 = vector.broadcast %cst_140 : f32 to vector<2x32xf32>
    %348 = arith.addf %347, %346 : vector<2x32xf32>
    %349 = arith.divf %347, %348 : vector<2x32xf32>
    %350 = vector.extract_strided_slice %325 {offsets = [0, 64], sizes = [2, 32], strides = [1, 1]} : vector<2x96xf32> to vector<2x32xf32>
    %351 = vector.extract_strided_slice %333 {offsets = [0, 64], sizes = [2, 32], strides = [1, 1]} : vector<2x96xf32> to vector<2x32xf32>
    %352 = arith.mulf %341, %351 : vector<2x32xf32>
    %353 = arith.addf %350, %352 : vector<2x32xf32>
    %354 = math.tanh %353 : vector<2x32xf32>
    %cst_141 = arith.constant 1.000000e+00 : f32
    %355 = vector.broadcast %cst_141 : f32 to vector<2x32xf32>
    %356 = arith.subf %355, %349 : vector<2x32xf32>
    %357 = arith.mulf %356, %354 : vector<2x32xf32>
    %358 = arith.mulf %349, %274 : vector<2x32xf32>
    %359 = arith.addf %357, %358 : vector<2x32xf32>
    %c1_142 = arith.constant 1 : index
    %360 = arith.index_cast %322 : i32 to index
    %c0_143 = arith.constant 0 : index
    %361 = vector.load %arg7[%c1_142, %360, %c0_143] : memref<2x16x32xf32, #tpu.memory_space<vmem>>, vector<1x2x32xf32>
    %362 = vector.shape_cast %361 : vector<1x2x32xf32> to vector<2x32xf32>
    %363 = vector.shape_cast %359 : vector<2x32xf32> to vector<1x2x32xf32>
    tpu.vector_store %arg7[%c1_142, %360, %c0_143], %363 {strides = array<i32>} : memref<2x16x32xf32, #tpu.memory_space<vmem>>, vector<1x2x32xf32>,
    %c4_i32 = arith.constant 4 : i32
    %c2_i32_144 = arith.constant 2 : i32
    %364 = arith.muli %c4_i32, %c2_i32_144 : i32
    %c0_145 = arith.constant 0 : index
    %365 = arith.index_cast %364 : i32 to index
    %c0_146 = arith.constant 0 : index
    %366 = vector.load %arg6[%c0_145, %365, %c0_146] : memref<2x16x96xf32, #tpu.memory_space<vmem>>, vector<1x2x96xf32>
    %367 = vector.shape_cast %366 : vector<1x2x96xf32> to vector<2x96xf32>
    %368 = arith.truncf %316 : vector<2x32xf32> to vector<2x32xbf16>
    %c0_147 = arith.constant 0 : index
    %c0_148 = arith.constant 0 : index
    %c0_149 = arith.constant 0 : index
    %369 = vector.load %arg2[%c0_147, %c0_148, %c0_149] : memref<2x32x96xbf16, #tpu.memory_space<vmem>>, vector<1x32x96xbf16>
    %370 = vector.shape_cast %369 : vector<1x32x96xbf16> to vector<32x96xbf16>
    %cst_150 = arith.constant dense<0.000000e+00> : vector<2x96xf32>
    %371 = tpu.matmul %368, %370, %cst_150 {dimension_numbers = #tpu.dot_dimension_numbers<[1], [0], [0], [1], [0, 0, 1, 1], [], []>} : vector<2x32xbf16>, vector<32x96xbf16>, vector<2x96xf32> -> vector<2x96xf32>
    %c0_151 = arith.constant 0 : index
    %c0_152 = arith.constant 0 : index
    %c0_153 = arith.constant 0 : index
    %372 = vector.load %arg4[%c0_151, %c0_152, %c0_153] : memref<2x1x96xf32, #tpu.memory_space<vmem>>, vector<1x1x96xf32>
    %373 = vector.shape_cast %372 : vector<1x1x96xf32> to vector<1x96xf32>
    %374 = vector.broadcast %373 : vector<1x96xf32> to vector<2x96xf32>
    %375 = arith.addf %371, %374 : vector<2x96xf32>
    %376 = vector.extract_strided_slice %367 {offsets = [0, 0], sizes = [2, 32], strides = [1, 1]} : vector<2x96xf32> to vector<2x32xf32>
    %377 = vector.extract_strided_slice %375 {offsets = [0, 0], sizes = [2, 32], strides = [1, 1]} : vector<2x96xf32> to vector<2x32xf32>
    %378 = arith.addf %376, %377 : vector<2x32xf32>
    %379 = arith.negf %378 : vector<2x32xf32>
    %380 = math.exp %379 : vector<2x32xf32>
    %cst_154 = arith.constant 1.000000e+00 : f32
    %381 = vector.broadcast %cst_154 : f32 to vector<2x32xf32>
    %382 = arith.addf %381, %380 : vector<2x32xf32>
    %383 = arith.divf %381, %382 : vector<2x32xf32>
    %384 = vector.extract_strided_slice %367 {offsets = [0, 32], sizes = [2, 32], strides = [1, 1]} : vector<2x96xf32> to vector<2x32xf32>
    %385 = vector.extract_strided_slice %375 {offsets = [0, 32], sizes = [2, 32], strides = [1, 1]} : vector<2x96xf32> to vector<2x32xf32>
    %386 = arith.addf %384, %385 : vector<2x32xf32>
    %387 = arith.negf %386 : vector<2x32xf32>
    %388 = math.exp %387 : vector<2x32xf32>
    %cst_155 = arith.constant 1.000000e+00 : f32
    %389 = vector.broadcast %cst_155 : f32 to vector<2x32xf32>
    %390 = arith.addf %389, %388 : vector<2x32xf32>
    %391 = arith.divf %389, %390 : vector<2x32xf32>
    %392 = vector.extract_strided_slice %367 {offsets = [0, 64], sizes = [2, 32], strides = [1, 1]} : vector<2x96xf32> to vector<2x32xf32>
    %393 = vector.extract_strided_slice %375 {offsets = [0, 64], sizes = [2, 32], strides = [1, 1]} : vector<2x96xf32> to vector<2x32xf32>
    %394 = arith.mulf %383, %393 : vector<2x32xf32>
    %395 = arith.addf %392, %394 : vector<2x32xf32>
    %396 = math.tanh %395 : vector<2x32xf32>
    %cst_156 = arith.constant 1.000000e+00 : f32
    %397 = vector.broadcast %cst_156 : f32 to vector<2x32xf32>
    %398 = arith.subf %397, %391 : vector<2x32xf32>
    %399 = arith.mulf %398, %396 : vector<2x32xf32>
    %400 = arith.mulf %391, %316 : vector<2x32xf32>
    %401 = arith.addf %399, %400 : vector<2x32xf32>
    %c0_157 = arith.constant 0 : index
    %402 = arith.index_cast %364 : i32 to index
    %c0_158 = arith.constant 0 : index
    %403 = vector.load %arg7[%c0_157, %402, %c0_158] : memref<2x16x32xf32, #tpu.memory_space<vmem>>, vector<1x2x32xf32>
    %404 = vector.shape_cast %403 : vector<1x2x32xf32> to vector<2x32xf32>
    %405 = vector.shape_cast %401 : vector<2x32xf32> to vector<1x2x32xf32>
    tpu.vector_store %arg7[%c0_157, %402, %c0_158], %405 {strides = array<i32>} : memref<2x16x32xf32, #tpu.memory_space<vmem>>, vector<1x2x32xf32>,
    %c7_i32_159 = arith.constant 7 : i32
    %406 = arith.subi %c7_i32_159, %c4_i32 : i32
    %c2_i32_160 = arith.constant 2 : i32
    %407 = arith.muli %406, %c2_i32_160 : i32
    %c1_161 = arith.constant 1 : index
    %408 = arith.index_cast %407 : i32 to index
    %c0_162 = arith.constant 0 : index
    %409 = vector.load %arg6[%c1_161, %408, %c0_162] : memref<2x16x96xf32, #tpu.memory_space<vmem>>, vector<1x2x96xf32>
    %410 = vector.shape_cast %409 : vector<1x2x96xf32> to vector<2x96xf32>
    %411 = arith.truncf %359 : vector<2x32xf32> to vector<2x32xbf16>
    %c1_163 = arith.constant 1 : index
    %c0_164 = arith.constant 0 : index
    %c0_165 = arith.constant 0 : index
    %412 = vector.load %arg2[%c1_163, %c0_164, %c0_165] : memref<2x32x96xbf16, #tpu.memory_space<vmem>>, vector<1x32x96xbf16>
    %413 = vector.shape_cast %412 : vector<1x32x96xbf16> to vector<32x96xbf16>
    %cst_166 = arith.constant dense<0.000000e+00> : vector<2x96xf32>
    %414 = tpu.matmul %411, %413, %cst_166 {dimension_numbers = #tpu.dot_dimension_numbers<[1], [0], [0], [1], [0, 0, 1, 1], [], []>} : vector<2x32xbf16>, vector<32x96xbf16>, vector<2x96xf32> -> vector<2x96xf32>
    %c1_167 = arith.constant 1 : index
    %c0_168 = arith.constant 0 : index
    %c0_169 = arith.constant 0 : index
    %415 = vector.load %arg4[%c1_167, %c0_168, %c0_169] : memref<2x1x96xf32, #tpu.memory_space<vmem>>, vector<1x1x96xf32>
    %416 = vector.shape_cast %415 : vector<1x1x96xf32> to vector<1x96xf32>
    %417 = vector.broadcast %416 : vector<1x96xf32> to vector<2x96xf32>
    %418 = arith.addf %414, %417 : vector<2x96xf32>
    %419 = vector.extract_strided_slice %410 {offsets = [0, 0], sizes = [2, 32], strides = [1, 1]} : vector<2x96xf32> to vector<2x32xf32>
    %420 = vector.extract_strided_slice %418 {offsets = [0, 0], sizes = [2, 32], strides = [1, 1]} : vector<2x96xf32> to vector<2x32xf32>
    %421 = arith.addf %419, %420 : vector<2x32xf32>
    %422 = arith.negf %421 : vector<2x32xf32>
    %423 = math.exp %422 : vector<2x32xf32>
    %cst_170 = arith.constant 1.000000e+00 : f32
    %424 = vector.broadcast %cst_170 : f32 to vector<2x32xf32>
    %425 = arith.addf %424, %423 : vector<2x32xf32>
    %426 = arith.divf %424, %425 : vector<2x32xf32>
    %427 = vector.extract_strided_slice %410 {offsets = [0, 32], sizes = [2, 32], strides = [1, 1]} : vector<2x96xf32> to vector<2x32xf32>
    %428 = vector.extract_strided_slice %418 {offsets = [0, 32], sizes = [2, 32], strides = [1, 1]} : vector<2x96xf32> to vector<2x32xf32>
    %429 = arith.addf %427, %428 : vector<2x32xf32>
    %430 = arith.negf %429 : vector<2x32xf32>
    %431 = math.exp %430 : vector<2x32xf32>
    %cst_171 = arith.constant 1.000000e+00 : f32
    %432 = vector.broadcast %cst_171 : f32 to vector<2x32xf32>
    %433 = arith.addf %432, %431 : vector<2x32xf32>
    %434 = arith.divf %432, %433 : vector<2x32xf32>
    %435 = vector.extract_strided_slice %410 {offsets = [0, 64], sizes = [2, 32], strides = [1, 1]} : vector<2x96xf32> to vector<2x32xf32>
    %436 = vector.extract_strided_slice %418 {offsets = [0, 64], sizes = [2, 32], strides = [1, 1]} : vector<2x96xf32> to vector<2x32xf32>
    %437 = arith.mulf %426, %436 : vector<2x32xf32>
    %438 = arith.addf %435, %437 : vector<2x32xf32>
    %439 = math.tanh %438 : vector<2x32xf32>
    %cst_172 = arith.constant 1.000000e+00 : f32
    %440 = vector.broadcast %cst_172 : f32 to vector<2x32xf32>
    %441 = arith.subf %440, %434 : vector<2x32xf32>
    %442 = arith.mulf %441, %439 : vector<2x32xf32>
    %443 = arith.mulf %434, %359 : vector<2x32xf32>
    %444 = arith.addf %442, %443 : vector<2x32xf32>
    %c1_173 = arith.constant 1 : index
    %445 = arith.index_cast %407 : i32 to index
    %c0_174 = arith.constant 0 : index
    %446 = vector.load %arg7[%c1_173, %445, %c0_174] : memref<2x16x32xf32, #tpu.memory_space<vmem>>, vector<1x2x32xf32>
    %447 = vector.shape_cast %446 : vector<1x2x32xf32> to vector<2x32xf32>
    %448 = vector.shape_cast %444 : vector<2x32xf32> to vector<1x2x32xf32>
    tpu.vector_store %arg7[%c1_173, %445, %c0_174], %448 {strides = array<i32>} : memref<2x16x32xf32, #tpu.memory_space<vmem>>, vector<1x2x32xf32>,
    %c5_i32 = arith.constant 5 : i32
    %c2_i32_175 = arith.constant 2 : i32
    %449 = arith.muli %c5_i32, %c2_i32_175 : i32
    %c0_176 = arith.constant 0 : index
    %450 = arith.index_cast %449 : i32 to index
    %c0_177 = arith.constant 0 : index
    %451 = vector.load %arg6[%c0_176, %450, %c0_177] : memref<2x16x96xf32, #tpu.memory_space<vmem>>, vector<1x2x96xf32>
    %452 = vector.shape_cast %451 : vector<1x2x96xf32> to vector<2x96xf32>
    %453 = arith.truncf %401 : vector<2x32xf32> to vector<2x32xbf16>
    %c0_178 = arith.constant 0 : index
    %c0_179 = arith.constant 0 : index
    %c0_180 = arith.constant 0 : index
    %454 = vector.load %arg2[%c0_178, %c0_179, %c0_180] : memref<2x32x96xbf16, #tpu.memory_space<vmem>>, vector<1x32x96xbf16>
    %455 = vector.shape_cast %454 : vector<1x32x96xbf16> to vector<32x96xbf16>
    %cst_181 = arith.constant dense<0.000000e+00> : vector<2x96xf32>
    %456 = tpu.matmul %453, %455, %cst_181 {dimension_numbers = #tpu.dot_dimension_numbers<[1], [0], [0], [1], [0, 0, 1, 1], [], []>} : vector<2x32xbf16>, vector<32x96xbf16>, vector<2x96xf32> -> vector<2x96xf32>
    %c0_182 = arith.constant 0 : index
    %c0_183 = arith.constant 0 : index
    %c0_184 = arith.constant 0 : index
    %457 = vector.load %arg4[%c0_182, %c0_183, %c0_184] : memref<2x1x96xf32, #tpu.memory_space<vmem>>, vector<1x1x96xf32>
    %458 = vector.shape_cast %457 : vector<1x1x96xf32> to vector<1x96xf32>
    %459 = vector.broadcast %458 : vector<1x96xf32> to vector<2x96xf32>
    %460 = arith.addf %456, %459 : vector<2x96xf32>
    %461 = vector.extract_strided_slice %452 {offsets = [0, 0], sizes = [2, 32], strides = [1, 1]} : vector<2x96xf32> to vector<2x32xf32>
    %462 = vector.extract_strided_slice %460 {offsets = [0, 0], sizes = [2, 32], strides = [1, 1]} : vector<2x96xf32> to vector<2x32xf32>
    %463 = arith.addf %461, %462 : vector<2x32xf32>
    %464 = arith.negf %463 : vector<2x32xf32>
    %465 = math.exp %464 : vector<2x32xf32>
    %cst_185 = arith.constant 1.000000e+00 : f32
    %466 = vector.broadcast %cst_185 : f32 to vector<2x32xf32>
    %467 = arith.addf %466, %465 : vector<2x32xf32>
    %468 = arith.divf %466, %467 : vector<2x32xf32>
    %469 = vector.extract_strided_slice %452 {offsets = [0, 32], sizes = [2, 32], strides = [1, 1]} : vector<2x96xf32> to vector<2x32xf32>
    %470 = vector.extract_strided_slice %460 {offsets = [0, 32], sizes = [2, 32], strides = [1, 1]} : vector<2x96xf32> to vector<2x32xf32>
    %471 = arith.addf %469, %470 : vector<2x32xf32>
    %472 = arith.negf %471 : vector<2x32xf32>
    %473 = math.exp %472 : vector<2x32xf32>
    %cst_186 = arith.constant 1.000000e+00 : f32
    %474 = vector.broadcast %cst_186 : f32 to vector<2x32xf32>
    %475 = arith.addf %474, %473 : vector<2x32xf32>
    %476 = arith.divf %474, %475 : vector<2x32xf32>
    %477 = vector.extract_strided_slice %452 {offsets = [0, 64], sizes = [2, 32], strides = [1, 1]} : vector<2x96xf32> to vector<2x32xf32>
    %478 = vector.extract_strided_slice %460 {offsets = [0, 64], sizes = [2, 32], strides = [1, 1]} : vector<2x96xf32> to vector<2x32xf32>
    %479 = arith.mulf %468, %478 : vector<2x32xf32>
    %480 = arith.addf %477, %479 : vector<2x32xf32>
    %481 = math.tanh %480 : vector<2x32xf32>
    %cst_187 = arith.constant 1.000000e+00 : f32
    %482 = vector.broadcast %cst_187 : f32 to vector<2x32xf32>
    %483 = arith.subf %482, %476 : vector<2x32xf32>
    %484 = arith.mulf %483, %481 : vector<2x32xf32>
    %485 = arith.mulf %476, %401 : vector<2x32xf32>
    %486 = arith.addf %484, %485 : vector<2x32xf32>
    %c0_188 = arith.constant 0 : index
    %487 = arith.index_cast %449 : i32 to index
    %c0_189 = arith.constant 0 : index
    %488 = vector.load %arg7[%c0_188, %487, %c0_189] : memref<2x16x32xf32, #tpu.memory_space<vmem>>, vector<1x2x32xf32>
    %489 = vector.shape_cast %488 : vector<1x2x32xf32> to vector<2x32xf32>
    %490 = vector.shape_cast %486 : vector<2x32xf32> to vector<1x2x32xf32>
    tpu.vector_store %arg7[%c0_188, %487, %c0_189], %490 {strides = array<i32>} : memref<2x16x32xf32, #tpu.memory_space<vmem>>, vector<1x2x32xf32>,
    %c7_i32_190 = arith.constant 7 : i32
    %491 = arith.subi %c7_i32_190, %c5_i32 : i32
    %c2_i32_191 = arith.constant 2 : i32
    %492 = arith.muli %491, %c2_i32_191 : i32
    %c1_192 = arith.constant 1 : index
    %493 = arith.index_cast %492 : i32 to index
    %c0_193 = arith.constant 0 : index
    %494 = vector.load %arg6[%c1_192, %493, %c0_193] : memref<2x16x96xf32, #tpu.memory_space<vmem>>, vector<1x2x96xf32>
    %495 = vector.shape_cast %494 : vector<1x2x96xf32> to vector<2x96xf32>
    %496 = arith.truncf %444 : vector<2x32xf32> to vector<2x32xbf16>
    %c1_194 = arith.constant 1 : index
    %c0_195 = arith.constant 0 : index
    %c0_196 = arith.constant 0 : index
    %497 = vector.load %arg2[%c1_194, %c0_195, %c0_196] : memref<2x32x96xbf16, #tpu.memory_space<vmem>>, vector<1x32x96xbf16>
    %498 = vector.shape_cast %497 : vector<1x32x96xbf16> to vector<32x96xbf16>
    %cst_197 = arith.constant dense<0.000000e+00> : vector<2x96xf32>
    %499 = tpu.matmul %496, %498, %cst_197 {dimension_numbers = #tpu.dot_dimension_numbers<[1], [0], [0], [1], [0, 0, 1, 1], [], []>} : vector<2x32xbf16>, vector<32x96xbf16>, vector<2x96xf32> -> vector<2x96xf32>
    %c1_198 = arith.constant 1 : index
    %c0_199 = arith.constant 0 : index
    %c0_200 = arith.constant 0 : index
    %500 = vector.load %arg4[%c1_198, %c0_199, %c0_200] : memref<2x1x96xf32, #tpu.memory_space<vmem>>, vector<1x1x96xf32>
    %501 = vector.shape_cast %500 : vector<1x1x96xf32> to vector<1x96xf32>
    %502 = vector.broadcast %501 : vector<1x96xf32> to vector<2x96xf32>
    %503 = arith.addf %499, %502 : vector<2x96xf32>
    %504 = vector.extract_strided_slice %495 {offsets = [0, 0], sizes = [2, 32], strides = [1, 1]} : vector<2x96xf32> to vector<2x32xf32>
    %505 = vector.extract_strided_slice %503 {offsets = [0, 0], sizes = [2, 32], strides = [1, 1]} : vector<2x96xf32> to vector<2x32xf32>
    %506 = arith.addf %504, %505 : vector<2x32xf32>
    %507 = arith.negf %506 : vector<2x32xf32>
    %508 = math.exp %507 : vector<2x32xf32>
    %cst_201 = arith.constant 1.000000e+00 : f32
    %509 = vector.broadcast %cst_201 : f32 to vector<2x32xf32>
    %510 = arith.addf %509, %508 : vector<2x32xf32>
    %511 = arith.divf %509, %510 : vector<2x32xf32>
    %512 = vector.extract_strided_slice %495 {offsets = [0, 32], sizes = [2, 32], strides = [1, 1]} : vector<2x96xf32> to vector<2x32xf32>
    %513 = vector.extract_strided_slice %503 {offsets = [0, 32], sizes = [2, 32], strides = [1, 1]} : vector<2x96xf32> to vector<2x32xf32>
    %514 = arith.addf %512, %513 : vector<2x32xf32>
    %515 = arith.negf %514 : vector<2x32xf32>
    %516 = math.exp %515 : vector<2x32xf32>
    %cst_202 = arith.constant 1.000000e+00 : f32
    %517 = vector.broadcast %cst_202 : f32 to vector<2x32xf32>
    %518 = arith.addf %517, %516 : vector<2x32xf32>
    %519 = arith.divf %517, %518 : vector<2x32xf32>
    %520 = vector.extract_strided_slice %495 {offsets = [0, 64], sizes = [2, 32], strides = [1, 1]} : vector<2x96xf32> to vector<2x32xf32>
    %521 = vector.extract_strided_slice %503 {offsets = [0, 64], sizes = [2, 32], strides = [1, 1]} : vector<2x96xf32> to vector<2x32xf32>
    %522 = arith.mulf %511, %521 : vector<2x32xf32>
    %523 = arith.addf %520, %522 : vector<2x32xf32>
    %524 = math.tanh %523 : vector<2x32xf32>
    %cst_203 = arith.constant 1.000000e+00 : f32
    %525 = vector.broadcast %cst_203 : f32 to vector<2x32xf32>
    %526 = arith.subf %525, %519 : vector<2x32xf32>
    %527 = arith.mulf %526, %524 : vector<2x32xf32>
    %528 = arith.mulf %519, %444 : vector<2x32xf32>
    %529 = arith.addf %527, %528 : vector<2x32xf32>
    %c1_204 = arith.constant 1 : index
    %530 = arith.index_cast %492 : i32 to index
    %c0_205 = arith.constant 0 : index
    %531 = vector.load %arg7[%c1_204, %530, %c0_205] : memref<2x16x32xf32, #tpu.memory_space<vmem>>, vector<1x2x32xf32>
    %532 = vector.shape_cast %531 : vector<1x2x32xf32> to vector<2x32xf32>
    %533 = vector.shape_cast %529 : vector<2x32xf32> to vector<1x2x32xf32>
    tpu.vector_store %arg7[%c1_204, %530, %c0_205], %533 {strides = array<i32>} : memref<2x16x32xf32, #tpu.memory_space<vmem>>, vector<1x2x32xf32>,
    %c6_i32 = arith.constant 6 : i32
    %c2_i32_206 = arith.constant 2 : i32
    %534 = arith.muli %c6_i32, %c2_i32_206 : i32
    %c0_207 = arith.constant 0 : index
    %535 = arith.index_cast %534 : i32 to index
    %c0_208 = arith.constant 0 : index
    %536 = vector.load %arg6[%c0_207, %535, %c0_208] : memref<2x16x96xf32, #tpu.memory_space<vmem>>, vector<1x2x96xf32>
    %537 = vector.shape_cast %536 : vector<1x2x96xf32> to vector<2x96xf32>
    %538 = arith.truncf %486 : vector<2x32xf32> to vector<2x32xbf16>
    %c0_209 = arith.constant 0 : index
    %c0_210 = arith.constant 0 : index
    %c0_211 = arith.constant 0 : index
    %539 = vector.load %arg2[%c0_209, %c0_210, %c0_211] : memref<2x32x96xbf16, #tpu.memory_space<vmem>>, vector<1x32x96xbf16>
    %540 = vector.shape_cast %539 : vector<1x32x96xbf16> to vector<32x96xbf16>
    %cst_212 = arith.constant dense<0.000000e+00> : vector<2x96xf32>
    %541 = tpu.matmul %538, %540, %cst_212 {dimension_numbers = #tpu.dot_dimension_numbers<[1], [0], [0], [1], [0, 0, 1, 1], [], []>} : vector<2x32xbf16>, vector<32x96xbf16>, vector<2x96xf32> -> vector<2x96xf32>
    %c0_213 = arith.constant 0 : index
    %c0_214 = arith.constant 0 : index
    %c0_215 = arith.constant 0 : index
    %542 = vector.load %arg4[%c0_213, %c0_214, %c0_215] : memref<2x1x96xf32, #tpu.memory_space<vmem>>, vector<1x1x96xf32>
    %543 = vector.shape_cast %542 : vector<1x1x96xf32> to vector<1x96xf32>
    %544 = vector.broadcast %543 : vector<1x96xf32> to vector<2x96xf32>
    %545 = arith.addf %541, %544 : vector<2x96xf32>
    %546 = vector.extract_strided_slice %537 {offsets = [0, 0], sizes = [2, 32], strides = [1, 1]} : vector<2x96xf32> to vector<2x32xf32>
    %547 = vector.extract_strided_slice %545 {offsets = [0, 0], sizes = [2, 32], strides = [1, 1]} : vector<2x96xf32> to vector<2x32xf32>
    %548 = arith.addf %546, %547 : vector<2x32xf32>
    %549 = arith.negf %548 : vector<2x32xf32>
    %550 = math.exp %549 : vector<2x32xf32>
    %cst_216 = arith.constant 1.000000e+00 : f32
    %551 = vector.broadcast %cst_216 : f32 to vector<2x32xf32>
    %552 = arith.addf %551, %550 : vector<2x32xf32>
    %553 = arith.divf %551, %552 : vector<2x32xf32>
    %554 = vector.extract_strided_slice %537 {offsets = [0, 32], sizes = [2, 32], strides = [1, 1]} : vector<2x96xf32> to vector<2x32xf32>
    %555 = vector.extract_strided_slice %545 {offsets = [0, 32], sizes = [2, 32], strides = [1, 1]} : vector<2x96xf32> to vector<2x32xf32>
    %556 = arith.addf %554, %555 : vector<2x32xf32>
    %557 = arith.negf %556 : vector<2x32xf32>
    %558 = math.exp %557 : vector<2x32xf32>
    %cst_217 = arith.constant 1.000000e+00 : f32
    %559 = vector.broadcast %cst_217 : f32 to vector<2x32xf32>
    %560 = arith.addf %559, %558 : vector<2x32xf32>
    %561 = arith.divf %559, %560 : vector<2x32xf32>
    %562 = vector.extract_strided_slice %537 {offsets = [0, 64], sizes = [2, 32], strides = [1, 1]} : vector<2x96xf32> to vector<2x32xf32>
    %563 = vector.extract_strided_slice %545 {offsets = [0, 64], sizes = [2, 32], strides = [1, 1]} : vector<2x96xf32> to vector<2x32xf32>
    %564 = arith.mulf %553, %563 : vector<2x32xf32>
    %565 = arith.addf %562, %564 : vector<2x32xf32>
    %566 = math.tanh %565 : vector<2x32xf32>
    %cst_218 = arith.constant 1.000000e+00 : f32
    %567 = vector.broadcast %cst_218 : f32 to vector<2x32xf32>
    %568 = arith.subf %567, %561 : vector<2x32xf32>
    %569 = arith.mulf %568, %566 : vector<2x32xf32>
    %570 = arith.mulf %561, %486 : vector<2x32xf32>
    %571 = arith.addf %569, %570 : vector<2x32xf32>
    %c0_219 = arith.constant 0 : index
    %572 = arith.index_cast %534 : i32 to index
    %c0_220 = arith.constant 0 : index
    %573 = vector.load %arg7[%c0_219, %572, %c0_220] : memref<2x16x32xf32, #tpu.memory_space<vmem>>, vector<1x2x32xf32>
    %574 = vector.shape_cast %573 : vector<1x2x32xf32> to vector<2x32xf32>
    %575 = vector.shape_cast %571 : vector<2x32xf32> to vector<1x2x32xf32>
    tpu.vector_store %arg7[%c0_219, %572, %c0_220], %575 {strides = array<i32>} : memref<2x16x32xf32, #tpu.memory_space<vmem>>, vector<1x2x32xf32>,
    %c7_i32_221 = arith.constant 7 : i32
    %576 = arith.subi %c7_i32_221, %c6_i32 : i32
    %c2_i32_222 = arith.constant 2 : i32
    %577 = arith.muli %576, %c2_i32_222 : i32
    %c1_223 = arith.constant 1 : index
    %578 = arith.index_cast %577 : i32 to index
    %c0_224 = arith.constant 0 : index
    %579 = vector.load %arg6[%c1_223, %578, %c0_224] : memref<2x16x96xf32, #tpu.memory_space<vmem>>, vector<1x2x96xf32>
    %580 = vector.shape_cast %579 : vector<1x2x96xf32> to vector<2x96xf32>
    %581 = arith.truncf %529 : vector<2x32xf32> to vector<2x32xbf16>
    %c1_225 = arith.constant 1 : index
    %c0_226 = arith.constant 0 : index
    %c0_227 = arith.constant 0 : index
    %582 = vector.load %arg2[%c1_225, %c0_226, %c0_227] : memref<2x32x96xbf16, #tpu.memory_space<vmem>>, vector<1x32x96xbf16>
    %583 = vector.shape_cast %582 : vector<1x32x96xbf16> to vector<32x96xbf16>
    %cst_228 = arith.constant dense<0.000000e+00> : vector<2x96xf32>
    %584 = tpu.matmul %581, %583, %cst_228 {dimension_numbers = #tpu.dot_dimension_numbers<[1], [0], [0], [1], [0, 0, 1, 1], [], []>} : vector<2x32xbf16>, vector<32x96xbf16>, vector<2x96xf32> -> vector<2x96xf32>
    %c1_229 = arith.constant 1 : index
    %c0_230 = arith.constant 0 : index
    %c0_231 = arith.constant 0 : index
    %585 = vector.load %arg4[%c1_229, %c0_230, %c0_231] : memref<2x1x96xf32, #tpu.memory_space<vmem>>, vector<1x1x96xf32>
    %586 = vector.shape_cast %585 : vector<1x1x96xf32> to vector<1x96xf32>
    %587 = vector.broadcast %586 : vector<1x96xf32> to vector<2x96xf32>
    %588 = arith.addf %584, %587 : vector<2x96xf32>
    %589 = vector.extract_strided_slice %580 {offsets = [0, 0], sizes = [2, 32], strides = [1, 1]} : vector<2x96xf32> to vector<2x32xf32>
    %590 = vector.extract_strided_slice %588 {offsets = [0, 0], sizes = [2, 32], strides = [1, 1]} : vector<2x96xf32> to vector<2x32xf32>
    %591 = arith.addf %589, %590 : vector<2x32xf32>
    %592 = arith.negf %591 : vector<2x32xf32>
    %593 = math.exp %592 : vector<2x32xf32>
    %cst_232 = arith.constant 1.000000e+00 : f32
    %594 = vector.broadcast %cst_232 : f32 to vector<2x32xf32>
    %595 = arith.addf %594, %593 : vector<2x32xf32>
    %596 = arith.divf %594, %595 : vector<2x32xf32>
    %597 = vector.extract_strided_slice %580 {offsets = [0, 32], sizes = [2, 32], strides = [1, 1]} : vector<2x96xf32> to vector<2x32xf32>
    %598 = vector.extract_strided_slice %588 {offsets = [0, 32], sizes = [2, 32], strides = [1, 1]} : vector<2x96xf32> to vector<2x32xf32>
    %599 = arith.addf %597, %598 : vector<2x32xf32>
    %600 = arith.negf %599 : vector<2x32xf32>
    %601 = math.exp %600 : vector<2x32xf32>
    %cst_233 = arith.constant 1.000000e+00 : f32
    %602 = vector.broadcast %cst_233 : f32 to vector<2x32xf32>
    %603 = arith.addf %602, %601 : vector<2x32xf32>
    %604 = arith.divf %602, %603 : vector<2x32xf32>
    %605 = vector.extract_strided_slice %580 {offsets = [0, 64], sizes = [2, 32], strides = [1, 1]} : vector<2x96xf32> to vector<2x32xf32>
    %606 = vector.extract_strided_slice %588 {offsets = [0, 64], sizes = [2, 32], strides = [1, 1]} : vector<2x96xf32> to vector<2x32xf32>
    %607 = arith.mulf %596, %606 : vector<2x32xf32>
    %608 = arith.addf %605, %607 : vector<2x32xf32>
    %609 = math.tanh %608 : vector<2x32xf32>
    %cst_234 = arith.constant 1.000000e+00 : f32
    %610 = vector.broadcast %cst_234 : f32 to vector<2x32xf32>
    %611 = arith.subf %610, %604 : vector<2x32xf32>
    %612 = arith.mulf %611, %609 : vector<2x32xf32>
    %613 = arith.mulf %604, %529 : vector<2x32xf32>
    %614 = arith.addf %612, %613 : vector<2x32xf32>
    %c1_235 = arith.constant 1 : index
    %615 = arith.index_cast %577 : i32 to index
    %c0_236 = arith.constant 0 : index
    %616 = vector.load %arg7[%c1_235, %615, %c0_236] : memref<2x16x32xf32, #tpu.memory_space<vmem>>, vector<1x2x32xf32>
    %617 = vector.shape_cast %616 : vector<1x2x32xf32> to vector<2x32xf32>
    %618 = vector.shape_cast %614 : vector<2x32xf32> to vector<1x2x32xf32>
    tpu.vector_store %arg7[%c1_235, %615, %c0_236], %618 {strides = array<i32>} : memref<2x16x32xf32, #tpu.memory_space<vmem>>, vector<1x2x32xf32>,
    %c7_i32_237 = arith.constant 7 : i32
    %c2_i32_238 = arith.constant 2 : i32
    %619 = arith.muli %c7_i32_237, %c2_i32_238 : i32
    %c0_239 = arith.constant 0 : index
    %620 = arith.index_cast %619 : i32 to index
    %c0_240 = arith.constant 0 : index
    %621 = vector.load %arg6[%c0_239, %620, %c0_240] : memref<2x16x96xf32, #tpu.memory_space<vmem>>, vector<1x2x96xf32>
    %622 = vector.shape_cast %621 : vector<1x2x96xf32> to vector<2x96xf32>
    %623 = arith.truncf %571 : vector<2x32xf32> to vector<2x32xbf16>
    %c0_241 = arith.constant 0 : index
    %c0_242 = arith.constant 0 : index
    %c0_243 = arith.constant 0 : index
    %624 = vector.load %arg2[%c0_241, %c0_242, %c0_243] : memref<2x32x96xbf16, #tpu.memory_space<vmem>>, vector<1x32x96xbf16>
    %625 = vector.shape_cast %624 : vector<1x32x96xbf16> to vector<32x96xbf16>
    %cst_244 = arith.constant dense<0.000000e+00> : vector<2x96xf32>
    %626 = tpu.matmul %623, %625, %cst_244 {dimension_numbers = #tpu.dot_dimension_numbers<[1], [0], [0], [1], [0, 0, 1, 1], [], []>} : vector<2x32xbf16>, vector<32x96xbf16>, vector<2x96xf32> -> vector<2x96xf32>
    %c0_245 = arith.constant 0 : index
    %c0_246 = arith.constant 0 : index
    %c0_247 = arith.constant 0 : index
    %627 = vector.load %arg4[%c0_245, %c0_246, %c0_247] : memref<2x1x96xf32, #tpu.memory_space<vmem>>, vector<1x1x96xf32>
    %628 = vector.shape_cast %627 : vector<1x1x96xf32> to vector<1x96xf32>
    %629 = vector.broadcast %628 : vector<1x96xf32> to vector<2x96xf32>
    %630 = arith.addf %626, %629 : vector<2x96xf32>
    %631 = vector.extract_strided_slice %622 {offsets = [0, 0], sizes = [2, 32], strides = [1, 1]} : vector<2x96xf32> to vector<2x32xf32>
    %632 = vector.extract_strided_slice %630 {offsets = [0, 0], sizes = [2, 32], strides = [1, 1]} : vector<2x96xf32> to vector<2x32xf32>
    %633 = arith.addf %631, %632 : vector<2x32xf32>
    %634 = arith.negf %633 : vector<2x32xf32>
    %635 = math.exp %634 : vector<2x32xf32>
    %cst_248 = arith.constant 1.000000e+00 : f32
    %636 = vector.broadcast %cst_248 : f32 to vector<2x32xf32>
    %637 = arith.addf %636, %635 : vector<2x32xf32>
    %638 = arith.divf %636, %637 : vector<2x32xf32>
    %639 = vector.extract_strided_slice %622 {offsets = [0, 32], sizes = [2, 32], strides = [1, 1]} : vector<2x96xf32> to vector<2x32xf32>
    %640 = vector.extract_strided_slice %630 {offsets = [0, 32], sizes = [2, 32], strides = [1, 1]} : vector<2x96xf32> to vector<2x32xf32>
    %641 = arith.addf %639, %640 : vector<2x32xf32>
    %642 = arith.negf %641 : vector<2x32xf32>
    %643 = math.exp %642 : vector<2x32xf32>
    %cst_249 = arith.constant 1.000000e+00 : f32
    %644 = vector.broadcast %cst_249 : f32 to vector<2x32xf32>
    %645 = arith.addf %644, %643 : vector<2x32xf32>
    %646 = arith.divf %644, %645 : vector<2x32xf32>
    %647 = vector.extract_strided_slice %622 {offsets = [0, 64], sizes = [2, 32], strides = [1, 1]} : vector<2x96xf32> to vector<2x32xf32>
    %648 = vector.extract_strided_slice %630 {offsets = [0, 64], sizes = [2, 32], strides = [1, 1]} : vector<2x96xf32> to vector<2x32xf32>
    %649 = arith.mulf %638, %648 : vector<2x32xf32>
    %650 = arith.addf %647, %649 : vector<2x32xf32>
    %651 = math.tanh %650 : vector<2x32xf32>
    %cst_250 = arith.constant 1.000000e+00 : f32
    %652 = vector.broadcast %cst_250 : f32 to vector<2x32xf32>
    %653 = arith.subf %652, %646 : vector<2x32xf32>
    %654 = arith.mulf %653, %651 : vector<2x32xf32>
    %655 = arith.mulf %646, %571 : vector<2x32xf32>
    %656 = arith.addf %654, %655 : vector<2x32xf32>
    %c0_251 = arith.constant 0 : index
    %657 = arith.index_cast %619 : i32 to index
    %c0_252 = arith.constant 0 : index
    %658 = vector.load %arg7[%c0_251, %657, %c0_252] : memref<2x16x32xf32, #tpu.memory_space<vmem>>, vector<1x2x32xf32>
    %659 = vector.shape_cast %658 : vector<1x2x32xf32> to vector<2x32xf32>
    %660 = vector.shape_cast %656 : vector<2x32xf32> to vector<1x2x32xf32>
    tpu.vector_store %arg7[%c0_251, %657, %c0_252], %660 {strides = array<i32>} : memref<2x16x32xf32, #tpu.memory_space<vmem>>, vector<1x2x32xf32>,
    %c7_i32_253 = arith.constant 7 : i32
    %661 = arith.subi %c7_i32_253, %c7_i32_237 : i32
    %c2_i32_254 = arith.constant 2 : i32
    %662 = arith.muli %661, %c2_i32_254 : i32
    %c1_255 = arith.constant 1 : index
    %663 = arith.index_cast %662 : i32 to index
    %c0_256 = arith.constant 0 : index
    %664 = vector.load %arg6[%c1_255, %663, %c0_256] : memref<2x16x96xf32, #tpu.memory_space<vmem>>, vector<1x2x96xf32>
    %665 = vector.shape_cast %664 : vector<1x2x96xf32> to vector<2x96xf32>
    %666 = arith.truncf %614 : vector<2x32xf32> to vector<2x32xbf16>
    %c1_257 = arith.constant 1 : index
    %c0_258 = arith.constant 0 : index
    %c0_259 = arith.constant 0 : index
    %667 = vector.load %arg2[%c1_257, %c0_258, %c0_259] : memref<2x32x96xbf16, #tpu.memory_space<vmem>>, vector<1x32x96xbf16>
    %668 = vector.shape_cast %667 : vector<1x32x96xbf16> to vector<32x96xbf16>
    %cst_260 = arith.constant dense<0.000000e+00> : vector<2x96xf32>
    %669 = tpu.matmul %666, %668, %cst_260 {dimension_numbers = #tpu.dot_dimension_numbers<[1], [0], [0], [1], [0, 0, 1, 1], [], []>} : vector<2x32xbf16>, vector<32x96xbf16>, vector<2x96xf32> -> vector<2x96xf32>
    %c1_261 = arith.constant 1 : index
    %c0_262 = arith.constant 0 : index
    %c0_263 = arith.constant 0 : index
    %670 = vector.load %arg4[%c1_261, %c0_262, %c0_263] : memref<2x1x96xf32, #tpu.memory_space<vmem>>, vector<1x1x96xf32>
    %671 = vector.shape_cast %670 : vector<1x1x96xf32> to vector<1x96xf32>
    %672 = vector.broadcast %671 : vector<1x96xf32> to vector<2x96xf32>
    %673 = arith.addf %669, %672 : vector<2x96xf32>
    %674 = vector.extract_strided_slice %665 {offsets = [0, 0], sizes = [2, 32], strides = [1, 1]} : vector<2x96xf32> to vector<2x32xf32>
    %675 = vector.extract_strided_slice %673 {offsets = [0, 0], sizes = [2, 32], strides = [1, 1]} : vector<2x96xf32> to vector<2x32xf32>
    %676 = arith.addf %674, %675 : vector<2x32xf32>
    %677 = arith.negf %676 : vector<2x32xf32>
    %678 = math.exp %677 : vector<2x32xf32>
    %cst_264 = arith.constant 1.000000e+00 : f32
    %679 = vector.broadcast %cst_264 : f32 to vector<2x32xf32>
    %680 = arith.addf %679, %678 : vector<2x32xf32>
    %681 = arith.divf %679, %680 : vector<2x32xf32>
    %682 = vector.extract_strided_slice %665 {offsets = [0, 32], sizes = [2, 32], strides = [1, 1]} : vector<2x96xf32> to vector<2x32xf32>
    %683 = vector.extract_strided_slice %673 {offsets = [0, 32], sizes = [2, 32], strides = [1, 1]} : vector<2x96xf32> to vector<2x32xf32>
    %684 = arith.addf %682, %683 : vector<2x32xf32>
    %685 = arith.negf %684 : vector<2x32xf32>
    %686 = math.exp %685 : vector<2x32xf32>
    %cst_265 = arith.constant 1.000000e+00 : f32
    %687 = vector.broadcast %cst_265 : f32 to vector<2x32xf32>
    %688 = arith.addf %687, %686 : vector<2x32xf32>
    %689 = arith.divf %687, %688 : vector<2x32xf32>
    %690 = vector.extract_strided_slice %665 {offsets = [0, 64], sizes = [2, 32], strides = [1, 1]} : vector<2x96xf32> to vector<2x32xf32>
    %691 = vector.extract_strided_slice %673 {offsets = [0, 64], sizes = [2, 32], strides = [1, 1]} : vector<2x96xf32> to vector<2x32xf32>
    %692 = arith.mulf %681, %691 : vector<2x32xf32>
    %693 = arith.addf %690, %692 : vector<2x32xf32>
    %694 = math.tanh %693 : vector<2x32xf32>
    %cst_266 = arith.constant 1.000000e+00 : f32
    %695 = vector.broadcast %cst_266 : f32 to vector<2x32xf32>
    %696 = arith.subf %695, %689 : vector<2x32xf32>
    %697 = arith.mulf %696, %694 : vector<2x32xf32>
    %698 = arith.mulf %689, %614 : vector<2x32xf32>
    %699 = arith.addf %697, %698 : vector<2x32xf32>
    %c1_267 = arith.constant 1 : index
    %700 = arith.index_cast %662 : i32 to index
    %c0_268 = arith.constant 0 : index
    %701 = vector.load %arg7[%c1_267, %700, %c0_268] : memref<2x16x32xf32, #tpu.memory_space<vmem>>, vector<1x2x32xf32>
    %702 = vector.shape_cast %701 : vector<1x2x32xf32> to vector<2x32xf32>
    %703 = vector.shape_cast %699 : vector<2x32xf32> to vector<1x2x32xf32>
    tpu.vector_store %arg7[%c1_267, %700, %c0_268], %703 {strides = array<i32>} : memref<2x16x32xf32, #tpu.memory_space<vmem>>, vector<1x2x32xf32>,
    %c8_i32 = arith.constant 8 : i32
    %c0_269 = arith.constant 0 : index
    %c0_270 = arith.constant 0 : index
    %c0_271 = arith.constant 0 : index
    %704 = vector.load %arg7[%c0_269, %c0_270, %c0_271] : memref<2x16x32xf32, #tpu.memory_space<vmem>>, vector<1x16x32xf32>
    %705 = vector.shape_cast %704 : vector<1x16x32xf32> to vector<16x32xf32>
    %c1_272 = arith.constant 1 : index
    %c0_273 = arith.constant 0 : index
    %c0_274 = arith.constant 0 : index
    %706 = vector.load %arg7[%c1_272, %c0_273, %c0_274] : memref<2x16x32xf32, #tpu.memory_space<vmem>>, vector<1x16x32xf32>
    %707 = vector.shape_cast %706 : vector<1x16x32xf32> to vector<16x32xf32>
    %708 = tpu.concatenate %705, %707 in 1 : vector<16x32xf32>, vector<16x32xf32> -> vector<16x64xf32>
    %c0_275 = arith.constant 0 : index
    %c0_276 = arith.constant 0 : index
    %709 = vector.load %arg5[%c0_275, %c0_276] : memref<16x64xf32, #tpu.memory_space<vmem>>, vector<16x64xf32>
    tpu.vector_store %arg5[%c0_275, %c0_276], %708 {strides = array<i32>} : memref<16x64xf32, #tpu.memory_space<vmem>>, vector<16x64xf32>,
    return
  }
}

</mosaic_0001>

<llo_original>
// kernel: tpu_custom_call.1
$region0: #{tpu_custom_call.1}
  #allocation0 [shape = 'u32[]', space=smem, size = 0x4, offset = 0x4, fixed_abs, tag = 'smem constant byte address 0x4 - core index']
  #allocation1 [shape = 'u32[144,128]{1,0:T(1,128)}', space=vmem, size = 0x12000, scoped, tag = 'internal scratch']
  #allocation2 [shape = 'f32[2,16,96]{2,1,0:T(8,128)}', space=vmem, size = 0x4000, scoped, tag = 'scratch operand']
  #allocation3 [shape = 'f32[2,16,32]{2,1,0:T(8,128)}', space=vmem, size = 0x4000, scoped, tag = 'scratch operand']
  %s0 = inlined_call_operand.hbm [shape: f32[16,32], index: 0, kind: input, shape index: {}]
  %s1 = inlined_call_operand.hbm [shape: bf16[2,32,96], index: 1, kind: input, shape index: {}]
  %s2 = inlined_call_operand.hbm [shape: bf16[2,32,96], index: 2, kind: input, shape index: {}]
  %s3 = inlined_call_operand.vmem [shape: f32[2,1,96], index: 3, kind: input, shape index: {}]
  %s4 = inlined_call_operand.vmem [shape: f32[2,1,96], index: 4, kind: input, shape index: {}]
  %s5 = inlined_call_operand.hbm [shape: f32[16,64], index: 5, kind: output, shape index: {}]
  %s6 = sld [smem:[#allocation0]]
  $region42: #{tpu_custom_call.1} parent=0
    _
  %s8 = ssub.s32 1, %s6
  %s9 = scalar_select 0, %s8, %s6
  $region1: #{tpu_custom_call.1} parent=0
    #allocation4 [shape = 'u8[8192]{0}', space=vmem, size = 0x2000, scoped, tag = 'input window, operand 0, single buffered']
    #allocation5 [shape = 's32[1]{0}', space=sflag, size = 0x4, scoped, tag = 'scoped memory for tpu_custom_call.1']
    #allocation6 [shape = 's32[1]{0}', space=sflag, size = 0x4, scoped, tag = 'scoped memory for tpu_custom_call.1']
    #allocation7 [shape = 'u8[16384]{0}', space=vmem, size = 0x4000, scoped, tag = 'input window, operand 1, single buffered']
    #allocation8 [shape = 's32[1]{0}', space=sflag, size = 0x4, scoped, tag = 'scoped memory for tpu_custom_call.1']
    #allocation9 [shape = 'u8[16384]{0}', space=vmem, size = 0x4000, scoped, tag = 'input window, operand 2, single buffered']
    #allocation10 [shape = 'u8[8192]{0}', space=vmem, size = 0x2000, scoped, tag = 'output window, operand 0, single buffered']
    %10 = vsyncpa [#allocation5], 0
    %11 = vsyncpa [#allocation8], 0
    %12 = vsyncpa [#allocation6], 0
    // Predicated region
    $region2: #{tpu_custom_call.1} parent=1 // pred_check
      _
    $region3: #{tpu_custom_call.1} parent=1 // pred_check_branch
      %14 = sbr.rel (0) target = $region5
    $region4: #{tpu_custom_call.1} parent=1 // pred_region
      %s16 = ssub.s32 256, 256
      %17 = vsyncadd [#allocation5], %s16
      %s18 = sshll.u32 [#allocation4], 4
      %s19 = int_to_ptr.vmem [resolvable:$true] %s18
      %24 = dma.hbm_to_vmem [thread:$0]  %s0, 256, %s19, [#allocation5], 128, 128, 8
    $region5: #{tpu_custom_call.1} parent=1 // pred_fallthru
      _
    // Predicated region
    $region6: #{tpu_custom_call.1} parent=1 // pred_check
      _
    $region7: #{tpu_custom_call.1} parent=1 // pred_check_branch
      %26 = sbr.rel (0) target = $region9
    $region8: #{tpu_custom_call.1} parent=1 // pred_region
      %s28 = ssub.s32 512, 512
      %29 = vsyncadd [#allocation8], %s28
      %s30 = sshll.u32 [#allocation7], 4
      %s31 = int_to_ptr.vmem [resolvable:$true] %s30
      %36 = dma.hbm_to_vmem [thread:$0]  %s1, 512, %s31, [#allocation8], 64, 64, 4
    $region9: #{tpu_custom_call.1} parent=1 // pred_fallthru
      _
    // Predicated region
    $region10: #{tpu_custom_call.1} parent=1 // pred_check
      _
    $region11: #{tpu_custom_call.1} parent=1 // pred_check_branch
      %38 = sbr.rel (0) target = $region13
    $region12: #{tpu_custom_call.1} parent=1 // pred_region
      %s40 = ssub.s32 512, 512
      %41 = vsyncadd [#allocation8], %s40
      %s42 = sshll.u32 [#allocation9], 4
      %s43 = int_to_ptr.vmem [resolvable:$true] %s42
      %48 = dma.hbm_to_vmem [thread:$0]  %s2, 512, %s43, [#allocation8], 64, 64, 4
    $region13: #{tpu_custom_call.1} parent=1 // pred_fallthru
      _
    // Predicated region
    $region14: #{tpu_custom_call.1} parent=1 // pred_check
      _
    $region15: #{tpu_custom_call.1} parent=1 // pred_check_branch
      %50 = sbr.rel (0) target = $region17
    $region16: #{tpu_custom_call.1} parent=1 // pred_region
      _
    $region17: #{tpu_custom_call.1} parent=1 // pred_fallthru
      _
    // Predicated region
    $region18: #{tpu_custom_call.1} parent=1 // pred_check
      _
    $region19: #{tpu_custom_call.1} parent=1 // pred_check_branch
      %52 = sbr.rel (0) target = $region21
    $region20: #{tpu_custom_call.1} parent=1 // pred_region
      _
    $region21: #{tpu_custom_call.1} parent=1 // pred_fallthru
      _
    // Predicated region
    $region22: #{tpu_custom_call.1} parent=1 // pred_check
      _
    $region23: #{tpu_custom_call.1} parent=1 // pred_check_branch
      %54 = sbr.rel (0) target = $region25
    $region24: #{tpu_custom_call.1} parent=1 // pred_region
      %55 = dma.done [#allocation5], 256
    $region25: #{tpu_custom_call.1} parent=1 // pred_fallthru
      _
    // Predicated region
    $region26: #{tpu_custom_call.1} parent=1 // pred_check
      _
    $region27: #{tpu_custom_call.1} parent=1 // pred_check_branch
      %57 = sbr.rel (0) target = $region29
    $region28: #{tpu_custom_call.1} parent=1 // pred_region
      %58 = dma.done [#allocation8], 512
    $region29: #{tpu_custom_call.1} parent=1 // pred_fallthru
      _
    // Predicated region
    $region30: #{tpu_custom_call.1} parent=1 // pred_check
      _
    $region31: #{tpu_custom_call.1} parent=1 // pred_check_branch
      %60 = sbr.rel (0) target = $region33
    $region32: #{tpu_custom_call.1} parent=1 // pred_region
      %61 = dma.done [#allocation8], 512
    $region33: #{tpu_custom_call.1} parent=1 // pred_fallthru
      _
    %v63 = vld [vmem:[#allocation4] sm:$0xff]
    %v64 = vld [vmem:[#allocation4 + $0x8] sm:$0xff]
    %v65 = vpack.c.bf16 %v64, %v63
    %v66 = vld [vmem:[#allocation7] sm:$0xf]
    %v67 = vld [vmem:[#allocation7 + $0x4] sm:$0xf]
    %v68 = vld [vmem:[#allocation7 + $0x8] sm:$0xf]
    %v69 = vld [vmem:[#allocation7 + $0xc] sm:$0xf]
    %v70 = vld [vmem:[%s3] sm:$0x1]
    %v72 = vlaneseq
    %v73 = vshrl.u32 %v72, 7
    %v74 = vsub.s32 0, %v73
    %v75 = vrot.slane %v70, %v74
    %v81 = vunpack.c.l.b16 %v66
    %v82 = vunpack.c.l.b16 %v67
    %v83 = vunpack.c.l.b16 %v68
    %v84 = vunpack.c.l.b16 %v69
    %v85 = vpack.c.b16 %v82, %v81
    %v86 = vpack.c.b16 %v84, %v83
    %vm89 = vcmask 261120
    %v91 = vsel %vm89, %v65, 0
    %93 = vmatprep.subr.bf16.mxu0 0
    %94 = vmatpush1.bf16.msra.mxu0 %v85
    %95 = vmatprep.subr.bf16.mxu0 0
    %96 = vmatpush1.bf16.msra.mxu0 %v86
    %97 = vmatprep.subr.bf16.mxu0 0
    %98 = vmatpush1.bf16.msra.mxu0 0
    %99 = vmatprep.subr.bf16.mxu0 0
    %100 = vmatpush1.bf16.msra.mxu0 0
    %101 = vmatprep.subr.bf16.mxu0 0
    %102 = vmatpush1.bf16.msra.mxu0 0
    %103 = vmatprep.subr.bf16.mxu0 0
    %104 = vmatpush1.bf16.msra.mxu0 0
    %105 = vmatprep.subr.bf16.mxu0 0
    %106 = vmatpush1.bf16.msra.mxu0 0
    %107 = vmatprep.subr.bf16.mxu0 0
    %108 = vmatpush1.bf16.msra.mxu0 0
    %109 = vmatprep.subr.bf16.mxu0 0
    %110 = vmatpush1.bf16.msra.mxu0 0
    %111 = vmatprep.subr.bf16.mxu0 0
    %112 = vmatpush1.bf16.msra.mxu0 0
    %113 = vmatprep.subr.bf16.mxu0 0
    %114 = vmatpush1.bf16.msra.mxu0 0
    %115 = vmatprep.subr.bf16.mxu0 0
    %116 = vmatpush1.bf16.msra.mxu0 0
    %117 = vmatprep.subr.bf16.mxu0 0
    %118 = vmatpush1.bf16.msra.mxu0 0
    %119 = vmatprep.subr.bf16.mxu0 0
    %120 = vmatpush1.bf16.msra.mxu0 0
    %121 = vmatprep.subr.bf16.mxu0 0
    %122 = vmatpush1.bf16.msra.mxu0 0
    %123 = vmatprep.subr.bf16.mxu0 0
    %124 = vmatpush1.bf16.msra.mxu0 0
    %125 = vmatprep.mubr.bf16.mxu0 0
    %126 = vmatmul.mubr.bf16.gmra.mrb[0].mxu0 %v91
    %v127 = vpop.f32.mrb[0].mxu0
    %v128 = vadd.f32 %v75, %v127
    %v129 = vpop.f32.mrb[0].mxu0
    %v130 = vpop.f32.mrb[0].mxu0
    %v131 = vadd.f32 %v75, %v130
    %v132 = vpop.f32.mrb[0].mxu0
    %133 = vdwg.mxu0
    %vm134 = vcmask 785408
    %135 = vst.msk [vmem:[#allocation2] sm:$0xff] %vm134, %v128
    %136 = vst.msk [vmem:[#allocation2 + $0x8] sm:$0xff] %vm134, %v131
    %s137 = scalar_lea.vmem [#allocation7], 16
    %v138 = vld [vmem:[%s137] sm:$0xf]
    %v139 = vld [vmem:[%s137 + $0x4] sm:$0xf]
    %v140 = vld [vmem:[%s137 + $0x8] sm:$0xf]
    %v141 = vld [vmem:[%s137 + $0xc] sm:$0xf]
    %s142 = scalar_lea.vmem %s3, 1
    %v143 = vld [vmem:[%s142] sm:$0x1]
    %v145 = vlaneseq
    %v146 = vshrl.u32 %v145, 7
    %v147 = vsub.s32 0, %v146
    %v148 = vrot.slane %v143, %v147
    %v154 = vunpack.c.l.b16 %v138
    %v155 = vunpack.c.l.b16 %v139
    %v156 = vunpack.c.l.b16 %v140
    %v157 = vunpack.c.l.b16 %v141
    %v158 = vpack.c.b16 %v155, %v154
    %v159 = vpack.c.b16 %v157, %v156
    %162 = vmatprep.subr.bf16.mxu0 0
    %163 = vmatpush1.bf16.msra.mxu0 %v158
    %164 = vmatprep.subr.bf16.mxu0 0
    %165 = vmatpush1.bf16.msra.mxu0 %v159
    %166 = vmatprep.subr.bf16.mxu0 0
    %167 = vmatpush1.bf16.msra.mxu0 0
    %168 = vmatprep.subr.bf16.mxu0 0
    %169 = vmatpush1.bf16.msra.mxu0 0
    %170 = vmatprep.subr.bf16.mxu0 0
    %171 = vmatpush1.bf16.msra.mxu0 0
    %172 = vmatprep.subr.bf16.mxu0 0
    %173 = vmatpush1.bf16.msra.mxu0 0
    %174 = vmatprep.subr.bf16.mxu0 0
    %175 = vmatpush1.bf16.msra.mxu0 0
    %176 = vmatprep.subr.bf16.mxu0 0
    %177 = vmatpush1.bf16.msra.mxu0 0
    %178 = vmatprep.subr.bf16.mxu0 0
    %179 = vmatpush1.bf16.msra.mxu0 0
    %180 = vmatprep.subr.bf16.mxu0 0
    %181 = vmatpush1.bf16.msra.mxu0 0
    %182 = vmatprep.subr.bf16.mxu0 0
    %183 = vmatpush1.bf16.msra.mxu0 0
    %184 = vmatprep.subr.bf16.mxu0 0
    %185 = vmatpush1.bf16.msra.mxu0 0
    %186 = vmatprep.subr.bf16.mxu0 0
    %187 = vmatpush1.bf16.msra.mxu0 0
    %188 = vmatprep.subr.bf16.mxu0 0
    %189 = vmatpush1.bf16.msra.mxu0 0
    %190 = vmatprep.subr.bf16.mxu0 0
    %191 = vmatpush1.bf16.msra.mxu0 0
    %192 = vmatprep.subr.bf16.mxu0 0
    %193 = vmatpush1.bf16.msra.mxu0 0
    %194 = vmatprep.mubr.bf16.mxu0 0
    %195 = vmatmul.mubr.bf16.gmra.mrb[0].mxu0 %v91
    %v196 = vpop.f32.mrb[0].mxu0
    %v197 = vadd.f32 %v148, %v196
    %v198 = vpop.f32.mrb[0].mxu0
    %v199 = vpop.f32.mrb[0].mxu0
    %v200 = vadd.f32 %v148, %v199
    %v201 = vpop.f32.mrb[0].mxu0
    %202 = vdwg.mxu0
    %s203 = scalar_lea.vmem [#allocation2], 16
    %204 = vst.msk [vmem:[%s203] sm:$0xff] %vm134, %v197
    %205 = vst.msk [vmem:[%s203 + $0x8] sm:$0xff] %vm134, %v200
    %v206 = vld [vmem:[#allocation2] sm:$0x3]
    %v207 = vld [vmem:[#allocation9] sm:$0xf]
    %v208 = vld [vmem:[#allocation9 + $0x4] sm:$0xf]
    %v209 = vld [vmem:[#allocation9 + $0x8] sm:$0xf]
    %v210 = vld [vmem:[#allocation9 + $0xc] sm:$0xf]
    %v211 = vld [vmem:[%s4] sm:$0x1]
    %v213 = vlaneseq
    %v214 = vshrl.u32 %v213, 7
    %v215 = vsub.s32 0, %v214
    %v216 = vrot.slane %v211, %v215
    %v222 = vunpack.c.l.b16 %v207
    %v223 = vunpack.c.l.b16 %v208
    %v224 = vunpack.c.l.b16 %v209
    %v225 = vunpack.c.l.b16 %v210
    %v226 = vpack.c.b16 %v223, %v222
    %v227 = vpack.c.b16 %v225, %v224
    %v231 = vsel %vm89, 0, 0
    %233 = vmatprep.subr.bf16.mxu0 0
    %234 = vmatpush1.bf16.msra.mxu0 %v226
    %235 = vmatprep.subr.bf16.mxu0 0
    %236 = vmatpush1.bf16.msra.mxu0 %v227
    %237 = vmatprep.subr.bf16.mxu0 0
    %238 = vmatpush1.bf16.msra.mxu0 0
    %239 = vmatprep.subr.bf16.mxu0 0
    %240 = vmatpush1.bf16.msra.mxu0 0
    %241 = vmatprep.subr.bf16.mxu0 0
    %242 = vmatpush1.bf16.msra.mxu0 0
    %243 = vmatprep.subr.bf16.mxu0 0
    %244 = vmatpush1.bf16.msra.mxu0 0
    %245 = vmatprep.subr.bf16.mxu0 0
    %246 = vmatpush1.bf16.msra.mxu0 0
    %247 = vmatprep.subr.bf16.mxu0 0
    %248 = vmatpush1.bf16.msra.mxu0 0
    %249 = vmatprep.subr.bf16.mxu0 0
    %250 = vmatpush1.bf16.msra.mxu0 0
    %251 = vmatprep.subr.bf16.mxu0 0
    %252 = vmatpush1.bf16.msra.mxu0 0
    %253 = vmatprep.subr.bf16.mxu0 0
    %254 = vmatpush1.bf16.msra.mxu0 0
    %255 = vmatprep.subr.bf16.mxu0 0
    %256 = vmatpush1.bf16.msra.mxu0 0
    %257 = vmatprep.subr.bf16.mxu0 0
    %258 = vmatpush1.bf16.msra.mxu0 0
    %259 = vmatprep.subr.bf16.mxu0 0
    %260 = vmatpush1.bf16.msra.mxu0 0
    %261 = vmatprep.subr.bf16.mxu0 0
    %262 = vmatpush1.bf16.msra.mxu0 0
    %263 = vmatprep.subr.bf16.mxu0 0
    %264 = vmatpush1.bf16.msra.mxu0 0
    %265 = vmatprep.mubr.bf16.mxu0 0
    %266 = vmatmul.mubr.bf16.gmra.mrb[0].mxu0 %v231
    %v267 = vpop.f32.mrb[0].mxu0
    %v268 = vadd.f32 %v216, %v267
    %v269 = vpop.f32.mrb[0].mxu0
    %v270 = vpop.f32.mrb[0].mxu0
    %v271 = vpop.f32.mrb[0].mxu0
    %272 = vdwg.mxu0
    %v273 = vadd.f32 %v206, %v268
    %v274 = vxor.u32 %v273, 2147483648
    %v275 = vmul.f32 %v274, 1.442695
    %v276 = vpow.pop %v275
    %v277 = vadd.f32 %v276, 1.0
    %v278 = vrcp.pop %v277
    %v279 = vmul.f32 1.0, %v278
    %281 = vrot.lane.b32.xlu0 %v268, 64
    %v282 = vpop.permute.xlu0 %281
    %v284 = vmul.f32 %v279, %v282
    %286 = vrot.lane.b32.xlu0 %v284, 64
    %v287 = vpop.permute.xlu0 %286
    %v289 = vadd.f32 %v206, %v287
    %v290 = vtanh.pop %v289
    %v291 = vsub.f32 1.0, %v279
    %293 = vrot.lane.b32.xlu0 %v290, 96
    %v294 = vpop.permute.xlu0 %293
    %v296 = vmul.f32 %v291, %v294
    %v297 = vmul.f32 %v279, 0.0
    %v298 = vadd.f32 %v296, %v297
    %300 = vrot.lane.b32.xlu0 %v298, 96
    %v301 = vpop.permute.xlu0 %300
    %vm303 = vcmask 254976
    %304 = vst.msk [vmem:[#allocation3] sm:$0x3] %vm303, %v301
    %v305 = vld [vmem:[%s203 + $0xe] sm:$0x3]
    %s306 = scalar_lea.vmem [#allocation9], 16
    %v307 = vld [vmem:[%s306] sm:$0xf]
    %v308 = vld [vmem:[%s306 + $0x4] sm:$0xf]
    %v309 = vld [vmem:[%s306 + $0x8] sm:$0xf]
    %v310 = vld [vmem:[%s306 + $0xc] sm:$0xf]
    %s311 = scalar_lea.vmem %s4, 1
    %v312 = vld [vmem:[%s311] sm:$0x1]
    %v314 = vlaneseq
    %v315 = vshrl.u32 %v314, 7
    %v316 = vsub.s32 0, %v315
    %v317 = vrot.slane %v312, %v316
    %v323 = vunpack.c.l.b16 %v307
    %v324 = vunpack.c.l.b16 %v308
    %v325 = vunpack.c.l.b16 %v309
    %v326 = vunpack.c.l.b16 %v310
    %v327 = vpack.c.b16 %v324, %v323
    %v328 = vpack.c.b16 %v326, %v325
    %331 = vmatprep.subr.bf16.mxu0 0
    %332 = vmatpush1.bf16.msra.mxu0 %v327
    %333 = vmatprep.subr.bf16.mxu0 0
    %334 = vmatpush1.bf16.msra.mxu0 %v328
    %335 = vmatprep.subr.bf16.mxu0 0
    %336 = vmatpush1.bf16.msra.mxu0 0
    %337 = vmatprep.subr.bf16.mxu0 0
    %338 = vmatpush1.bf16.msra.mxu0 0
    %339 = vmatprep.subr.bf16.mxu0 0
    %340 = vmatpush1.bf16.msra.mxu0 0
    %341 = vmatprep.subr.bf16.mxu0 0
    %342 = vmatpush1.bf16.msra.mxu0 0
    %343 = vmatprep.subr.bf16.mxu0 0
    %344 = vmatpush1.bf16.msra.mxu0 0
    %345 = vmatprep.subr.bf16.mxu0 0
    %346 = vmatpush1.bf16.msra.mxu0 0
    %347 = vmatprep.subr.bf16.mxu0 0
    %348 = vmatpush1.bf16.msra.mxu0 0
    %349 = vmatprep.subr.bf16.mxu0 0
    %350 = vmatpush1.bf16.msra.mxu0 0
    %351 = vmatprep.subr.bf16.mxu0 0
    %352 = vmatpush1.bf16.msra.mxu0 0
    %353 = vmatprep.subr.bf16.mxu0 0
    %354 = vmatpush1.bf16.msra.mxu0 0
    %355 = vmatprep.subr.bf16.mxu0 0
    %356 = vmatpush1.bf16.msra.mxu0 0
    %357 = vmatprep.subr.bf16.mxu0 0
    %358 = vmatpush1.bf16.msra.mxu0 0
    %359 = vmatprep.subr.bf16.mxu0 0
    %360 = vmatpush1.bf16.msra.mxu0 0
    %361 = vmatprep.subr.bf16.mxu0 0
    %362 = vmatpush1.bf16.msra.mxu0 0
    %363 = vmatprep.mubr.bf16.mxu0 0
    %364 = vmatmul.mubr.bf16.gmra.mrb[0].mxu0 %v231
    %v365 = vpop.f32.mrb[0].mxu0
    %v366 = vadd.f32 %v317, %v365
    %v367 = vpop.f32.mrb[0].mxu0
    %v368 = vpop.f32.mrb[0].mxu0
    %v369 = vpop.f32.mrb[0].mxu0
    %370 = vdwg.mxu0
    %v371 = vadd.f32 %v305, %v366
    %v372 = vxor.u32 %v371, 2147483648
    %v373 = vmul.f32 %v372, 1.442695
    %v374 = vpow.pop %v373
    %v375 = vadd.f32 %v374, 1.0
    %v376 = vrcp.pop %v375
    %v377 = vmul.f32 1.0, %v376
    %379 = vrot.lane.b32.xlu0 %v366, 64
    %v380 = vpop.permute.xlu0 %379
    %v382 = vmul.f32 %v377, %v380
    %384 = vrot.lane.b32.xlu0 %v382, 64
    %v385 = vpop.permute.xlu0 %384
    %v387 = vadd.f32 %v305, %v385
    %v388 = vtanh.pop %v387
    %v389 = vsub.f32 1.0, %v377
    %391 = vrot.lane.b32.xlu0 %v388, 96
    %v392 = vpop.permute.xlu0 %391
    %v394 = vmul.f32 %v389, %v392
    %v395 = vmul.f32 %v377, 0.0
    %v396 = vadd.f32 %v394, %v395
    %398 = vrot.lane.b32.xlu0 %v396, 96
    %v399 = vpop.permute.xlu0 %398
    %s401 = scalar_lea.vmem [#allocation3], 16
    %402 = vst.msk [vmem:[%s401 + $0xe] sm:$0x3] %vm303, %v399
    %v403 = vld [vmem:[#allocation2 + $0x2] sm:$0x3]
    %v404 = vpack.c.bf16 %v298, %v298
    %v405 = vld [vmem:[#allocation9] sm:$0xf]
    %v406 = vld [vmem:[#allocation9 + $0x4] sm:$0xf]
    %v407 = vld [vmem:[#allocation9 + $0x8] sm:$0xf]
    %v408 = vld [vmem:[#allocation9 + $0xc] sm:$0xf]
    %v409 = vld [vmem:[%s4] sm:$0x1]
    %v411 = vlaneseq
    %v412 = vshrl.u32 %v411, 7
    %v413 = vsub.s32 0, %v412
    %v414 = vrot.slane %v409, %v413
    %417 = vrot.lane.b32.xlu0 %v404, 96
    %v418 = vpop.permute.xlu0 %417
    %v423 = vunpack.c.l.b16 %v405
    %v424 = vunpack.c.l.b16 %v406
    %v425 = vunpack.c.l.b16 %v407
    %v426 = vunpack.c.l.b16 %v408
    %v427 = vpack.c.b16 %v424, %v423
    %v428 = vpack.c.b16 %v426, %v425
    %v432 = vsel %vm89, %v418, 0
    %434 = vmatprep.subr.bf16.mxu0 0
    %435 = vmatpush1.bf16.msra.mxu0 %v427
    %436 = vmatprep.subr.bf16.mxu0 0
    %437 = vmatpush1.bf16.msra.mxu0 %v428
    %438 = vmatprep.subr.bf16.mxu0 0
    %439 = vmatpush1.bf16.msra.mxu0 0
    %440 = vmatprep.subr.bf16.mxu0 0
    %441 = vmatpush1.bf16.msra.mxu0 0
    %442 = vmatprep.subr.bf16.mxu0 0
    %443 = vmatpush1.bf16.msra.mxu0 0
    %444 = vmatprep.subr.bf16.mxu0 0
    %445 = vmatpush1.bf16.msra.mxu0 0
    %446 = vmatprep.subr.bf16.mxu0 0
    %447 = vmatpush1.bf16.msra.mxu0 0
    %448 = vmatprep.subr.bf16.mxu0 0
    %449 = vmatpush1.bf16.msra.mxu0 0
    %450 = vmatprep.subr.bf16.mxu0 0
    %451 = vmatpush1.bf16.msra.mxu0 0
    %452 = vmatprep.subr.bf16.mxu0 0
    %453 = vmatpush1.bf16.msra.mxu0 0
    %454 = vmatprep.subr.bf16.mxu0 0
    %455 = vmatpush1.bf16.msra.mxu0 0
    %456 = vmatprep.subr.bf16.mxu0 0
    %457 = vmatpush1.bf16.msra.mxu0 0
    %458 = vmatprep.subr.bf16.mxu0 0
    %459 = vmatpush1.bf16.msra.mxu0 0
    %460 = vmatprep.subr.bf16.mxu0 0
    %461 = vmatpush1.bf16.msra.mxu0 0
    %462 = vmatprep.subr.bf16.mxu0 0
    %463 = vmatpush1.bf16.msra.mxu0 0
    %464 = vmatprep.subr.bf16.mxu0 0
    %465 = vmatpush1.bf16.msra.mxu0 0
    %466 = vmatprep.mubr.bf16.mxu0 0
    %467 = vmatmul.mubr.bf16.gmra.mrb[0].mxu0 %v432
    %v468 = vpop.f32.mrb[0].mxu0
    %v469 = vadd.f32 %v414, %v468
    %v470 = vpop.f32.mrb[0].mxu0
    %v471 = vpop.f32.mrb[0].mxu0
    %v472 = vpop.f32.mrb[0].mxu0
    %473 = vdwg.mxu0
    %v474 = vadd.f32 %v403, %v469
    %v475 = vxor.u32 %v474, 2147483648
    %v476 = vmul.f32 %v475, 1.442695
    %v477 = vpow.pop %v476
    %v478 = vadd.f32 %v477, 1.0
    %v479 = vrcp.pop %v478
    %v480 = vmul.f32 1.0, %v479
    %482 = vrot.lane.b32.xlu0 %v469, 64
    %v483 = vpop.permute.xlu0 %482
    %v485 = vmul.f32 %v480, %v483
    %487 = vrot.lane.b32.xlu0 %v485, 64
    %v488 = vpop.permute.xlu0 %487
    %v490 = vadd.f32 %v403, %v488
    %v491 = vtanh.pop %v490
    %v492 = vsub.f32 1.0, %v480
    %494 = vrot.lane.b32.xlu0 %v491, 96
    %v495 = vpop.permute.xlu0 %494
    %v497 = vmul.f32 %v492, %v495
    %v498 = vmul.f32 %v480, %v298
    %v499 = vadd.f32 %v497, %v498
    %501 = vrot.lane.b32.xlu0 %v499, 96
    %v502 = vpop.permute.xlu0 %501
    %504 = vst.msk [vmem:[#allocation3 + $0x2] sm:$0x3] %vm303, %v502
    %v505 = vld [vmem:[%s203 + $0xc] sm:$0x3]
    %v506 = vpack.c.bf16 %v396, %v396
    %v507 = vld [vmem:[%s306] sm:$0xf]
    %v508 = vld [vmem:[%s306 + $0x4] sm:$0xf]
    %v509 = vld [vmem:[%s306 + $0x8] sm:$0xf]
    %v510 = vld [vmem:[%s306 + $0xc] sm:$0xf]
    %v511 = vld [vmem:[%s311] sm:$0x1]
    %v513 = vlaneseq
    %v514 = vshrl.u32 %v513, 7
    %v515 = vsub.s32 0, %v514
    %v516 = vrot.slane %v511, %v515
    %519 = vrot.lane.b32.xlu0 %v506, 96
    %v520 = vpop.permute.xlu0 %519
    %v525 = vunpack.c.l.b16 %v507
    %v526 = vunpack.c.l.b16 %v508
    %v527 = vunpack.c.l.b16 %v509
    %v528 = vunpack.c.l.b16 %v510
    %v529 = vpack.c.b16 %v526, %v525
    %v530 = vpack.c.b16 %v528, %v527
    %v534 = vsel %vm89, %v520, 0
    %536 = vmatprep.subr.bf16.mxu0 0
    %537 = vmatpush1.bf16.msra.mxu0 %v529
    %538 = vmatprep.subr.bf16.mxu0 0
    %539 = vmatpush1.bf16.msra.mxu0 %v530
    %540 = vmatprep.subr.bf16.mxu0 0
    %541 = vmatpush1.bf16.msra.mxu0 0
    %542 = vmatprep.subr.bf16.mxu0 0
    %543 = vmatpush1.bf16.msra.mxu0 0
    %544 = vmatprep.subr.bf16.mxu0 0
    %545 = vmatpush1.bf16.msra.mxu0 0
    %546 = vmatprep.subr.bf16.mxu0 0
    %547 = vmatpush1.bf16.msra.mxu0 0
    %548 = vmatprep.subr.bf16.mxu0 0
    %549 = vmatpush1.bf16.msra.mxu0 0
    %550 = vmatprep.subr.bf16.mxu0 0
    %551 = vmatpush1.bf16.msra.mxu0 0
    %552 = vmatprep.subr.bf16.mxu0 0
    %553 = vmatpush1.bf16.msra.mxu0 0
    %554 = vmatprep.subr.bf16.mxu0 0
    %555 = vmatpush1.bf16.msra.mxu0 0
    %556 = vmatprep.subr.bf16.mxu0 0
    %557 = vmatpush1.bf16.msra.mxu0 0
    %558 = vmatprep.subr.bf16.mxu0 0
    %559 = vmatpush1.bf16.msra.mxu0 0
    %560 = vmatprep.subr.bf16.mxu0 0
    %561 = vmatpush1.bf16.msra.mxu0 0
    %562 = vmatprep.subr.bf16.mxu0 0
    %563 = vmatpush1.bf16.msra.mxu0 0
    %564 = vmatprep.subr.bf16.mxu0 0
    %565 = vmatpush1.bf16.msra.mxu0 0
    %566 = vmatprep.subr.bf16.mxu0 0
    %567 = vmatpush1.bf16.msra.mxu0 0
    %568 = vmatprep.mubr.bf16.mxu0 0
    %569 = vmatmul.mubr.bf16.gmra.mrb[0].mxu0 %v534
    %v570 = vpop.f32.mrb[0].mxu0
    %v571 = vadd.f32 %v516, %v570
    %v572 = vpop.f32.mrb[0].mxu0
    %v573 = vpop.f32.mrb[0].mxu0
    %v574 = vpop.f32.mrb[0].mxu0
    %575 = vdwg.mxu0
    %v576 = vadd.f32 %v505, %v571
    %v577 = vxor.u32 %v576, 2147483648
    %v578 = vmul.f32 %v577, 1.442695
    %v579 = vpow.pop %v578
    %v580 = vadd.f32 %v579, 1.0
    %v581 = vrcp.pop %v580
    %v582 = vmul.f32 1.0, %v581
    %584 = vrot.lane.b32.xlu0 %v571, 64
    %v585 = vpop.permute.xlu0 %584
    %v587 = vmul.f32 %v582, %v585
    %589 = vrot.lane.b32.xlu0 %v587, 64
    %v590 = vpop.permute.xlu0 %589
    %v592 = vadd.f32 %v505, %v590
    %v593 = vtanh.pop %v592
    %v594 = vsub.f32 1.0, %v582
    %596 = vrot.lane.b32.xlu0 %v593, 96
    %v597 = vpop.permute.xlu0 %596
    %v599 = vmul.f32 %v594, %v597
    %v600 = vmul.f32 %v582, %v396
    %v601 = vadd.f32 %v599, %v600
    %603 = vrot.lane.b32.xlu0 %v601, 96
    %v604 = vpop.permute.xlu0 %603
    %606 = vst.msk [vmem:[%s401 + $0xc] sm:$0x3] %vm303, %v604
    %v607 = vld [vmem:[#allocation2 + $0x4] sm:$0x3]
    %v608 = vpack.c.bf16 %v499, %v499
    %v609 = vld [vmem:[#allocation9] sm:$0xf]
    %v610 = vld [vmem:[#allocation9 + $0x4] sm:$0xf]
    %v611 = vld [vmem:[#allocation9 + $0x8] sm:$0xf]
    %v612 = vld [vmem:[#allocation9 + $0xc] sm:$0xf]
    %v613 = vld [vmem:[%s4] sm:$0x1]
    %v615 = vlaneseq
    %v616 = vshrl.u32 %v615, 7
    %v617 = vsub.s32 0, %v616
    %v618 = vrot.slane %v613, %v617
    %621 = vrot.lane.b32.xlu0 %v608, 96
    %v622 = vpop.permute.xlu0 %621
    %v627 = vunpack.c.l.b16 %v609
    %v628 = vunpack.c.l.b16 %v610
    %v629 = vunpack.c.l.b16 %v611
    %v630 = vunpack.c.l.b16 %v612
    %v631 = vpack.c.b16 %v628, %v627
    %v632 = vpack.c.b16 %v630, %v629
    %v636 = vsel %vm89, %v622, 0
    %638 = vmatprep.subr.bf16.mxu0 0
    %639 = vmatpush1.bf16.msra.mxu0 %v631
    %640 = vmatprep.subr.bf16.mxu0 0
    %641 = vmatpush1.bf16.msra.mxu0 %v632
    %642 = vmatprep.subr.bf16.mxu0 0
    %643 = vmatpush1.bf16.msra.mxu0 0
    %644 = vmatprep.subr.bf16.mxu0 0
    %645 = vmatpush1.bf16.msra.mxu0 0
    %646 = vmatprep.subr.bf16.mxu0 0
    %647 = vmatpush1.bf16.msra.mxu0 0
    %648 = vmatprep.subr.bf16.mxu0 0
    %649 = vmatpush1.bf16.msra.mxu0 0
    %650 = vmatprep.subr.bf16.mxu0 0
    %651 = vmatpush1.bf16.msra.mxu0 0
    %652 = vmatprep.subr.bf16.mxu0 0
    %653 = vmatpush1.bf16.msra.mxu0 0
    %654 = vmatprep.subr.bf16.mxu0 0
    %655 = vmatpush1.bf16.msra.mxu0 0
    %656 = vmatprep.subr.bf16.mxu0 0
    %657 = vmatpush1.bf16.msra.mxu0 0
    %658 = vmatprep.subr.bf16.mxu0 0
    %659 = vmatpush1.bf16.msra.mxu0 0
    %660 = vmatprep.subr.bf16.mxu0 0
    %661 = vmatpush1.bf16.msra.mxu0 0
    %662 = vmatprep.subr.bf16.mxu0 0
    %663 = vmatpush1.bf16.msra.mxu0 0
    %664 = vmatprep.subr.bf16.mxu0 0
    %665 = vmatpush1.bf16.msra.mxu0 0
    %666 = vmatprep.subr.bf16.mxu0 0
    %667 = vmatpush1.bf16.msra.mxu0 0
    %668 = vmatprep.subr.bf16.mxu0 0
    %669 = vmatpush1.bf16.msra.mxu0 0
    %670 = vmatprep.mubr.bf16.mxu0 0
    %671 = vmatmul.mubr.bf16.gmra.mrb[0].mxu0 %v636
    %v672 = vpop.f32.mrb[0].mxu0
    %v673 = vadd.f32 %v618, %v672
    %v674 = vpop.f32.mrb[0].mxu0
    %v675 = vpop.f32.mrb[0].mxu0
    %v676 = vpop.f32.mrb[0].mxu0
    %677 = vdwg.mxu0
    %v678 = vadd.f32 %v607, %v673
    %v679 = vxor.u32 %v678, 2147483648
    %v680 = vmul.f32 %v679, 1.442695
    %v681 = vpow.pop %v680
    %v682 = vadd.f32 %v681, 1.0
    %v683 = vrcp.pop %v682
    %v684 = vmul.f32 1.0, %v683
    %686 = vrot.lane.b32.xlu0 %v673, 64
    %v687 = vpop.permute.xlu0 %686
    %v689 = vmul.f32 %v684, %v687
    %691 = vrot.lane.b32.xlu0 %v689, 64
    %v692 = vpop.permute.xlu0 %691
    %v694 = vadd.f32 %v607, %v692
    %v695 = vtanh.pop %v694
    %v696 = vsub.f32 1.0, %v684
    %698 = vrot.lane.b32.xlu0 %v695, 96
    %v699 = vpop.permute.xlu0 %698
    %v701 = vmul.f32 %v696, %v699
    %v702 = vmul.f32 %v684, %v499
    %v703 = vadd.f32 %v701, %v702
    %705 = vrot.lane.b32.xlu0 %v703, 96
    %v706 = vpop.permute.xlu0 %705
    %708 = vst.msk [vmem:[#allocation3 + $0x4] sm:$0x3] %vm303, %v706
    %v709 = vld [vmem:[%s203 + $0xa] sm:$0x3]
    %v710 = vpack.c.bf16 %v601, %v601
    %v711 = vld [vmem:[%s306] sm:$0xf]
    %v712 = vld [vmem:[%s306 + $0x4] sm:$0xf]
    %v713 = vld [vmem:[%s306 + $0x8] sm:$0xf]
    %v714 = vld [vmem:[%s306 + $0xc] sm:$0xf]
    %v715 = vld [vmem:[%s311] sm:$0x1]
    %v717 = vlaneseq
    %v718 = vshrl.u32 %v717, 7
    %v719 = vsub.s32 0, %v718
    %v720 = vrot.slane %v715, %v719
    %723 = vrot.lane.b32.xlu0 %v710, 96
    %v724 = vpop.permute.xlu0 %723
    %v729 = vunpack.c.l.b16 %v711
    %v730 = vunpack.c.l.b16 %v712
    %v731 = vunpack.c.l.b16 %v713
    %v732 = vunpack.c.l.b16 %v714
    %v733 = vpack.c.b16 %v730, %v729
    %v734 = vpack.c.b16 %v732, %v731
    %v738 = vsel %vm89, %v724, 0
    %740 = vmatprep.subr.bf16.mxu0 0
    %741 = vmatpush1.bf16.msra.mxu0 %v733
    %742 = vmatprep.subr.bf16.mxu0 0
    %743 = vmatpush1.bf16.msra.mxu0 %v734
    %744 = vmatprep.subr.bf16.mxu0 0
    %745 = vmatpush1.bf16.msra.mxu0 0
    %746 = vmatprep.subr.bf16.mxu0 0
    %747 = vmatpush1.bf16.msra.mxu0 0
    %748 = vmatprep.subr.bf16.mxu0 0
    %749 = vmatpush1.bf16.msra.mxu0 0
    %750 = vmatprep.subr.bf16.mxu0 0
    %751 = vmatpush1.bf16.msra.mxu0 0
    %752 = vmatprep.subr.bf16.mxu0 0
    %753 = vmatpush1.bf16.msra.mxu0 0
    %754 = vmatprep.subr.bf16.mxu0 0
    %755 = vmatpush1.bf16.msra.mxu0 0
    %756 = vmatprep.subr.bf16.mxu0 0
    %757 = vmatpush1.bf16.msra.mxu0 0
    %758 = vmatprep.subr.bf16.mxu0 0
    %759 = vmatpush1.bf16.msra.mxu0 0
    %760 = vmatprep.subr.bf16.mxu0 0
    %761 = vmatpush1.bf16.msra.mxu0 0
    %762 = vmatprep.subr.bf16.mxu0 0
    %763 = vmatpush1.bf16.msra.mxu0 0
    %764 = vmatprep.subr.bf16.mxu0 0
    %765 = vmatpush1.bf16.msra.mxu0 0
    %766 = vmatprep.subr.bf16.mxu0 0
    %767 = vmatpush1.bf16.msra.mxu0 0
    %768 = vmatprep.subr.bf16.mxu0 0
    %769 = vmatpush1.bf16.msra.mxu0 0
    %770 = vmatprep.subr.bf16.mxu0 0
    %771 = vmatpush1.bf16.msra.mxu0 0
    %772 = vmatprep.mubr.bf16.mxu0 0
    %773 = vmatmul.mubr.bf16.gmra.mrb[0].mxu0 %v738
    %v774 = vpop.f32.mrb[0].mxu0
    %v775 = vadd.f32 %v720, %v774
    %v776 = vpop.f32.mrb[0].mxu0
    %v777 = vpop.f32.mrb[0].mxu0
    %v778 = vpop.f32.mrb[0].mxu0
    %779 = vdwg.mxu0
    %v780 = vadd.f32 %v709, %v775
    %v781 = vxor.u32 %v780, 2147483648
    %v782 = vmul.f32 %v781, 1.442695
    %v783 = vpow.pop %v782
    %v784 = vadd.f32 %v783, 1.0
    %v785 = vrcp.pop %v784
    %v786 = vmul.f32 1.0, %v785
    %788 = vrot.lane.b32.xlu0 %v775, 64
    %v789 = vpop.permute.xlu0 %788
    %v791 = vmul.f32 %v786, %v789
    %793 = vrot.lane.b32.xlu0 %v791, 64
    %v794 = vpop.permute.xlu0 %793
    %v796 = vadd.f32 %v709, %v794
    %v797 = vtanh.pop %v796
    %v798 = vsub.f32 1.0, %v786
    %800 = vrot.lane.b32.xlu0 %v797, 96
    %v801 = vpop.permute.xlu0 %800
    %v803 = vmul.f32 %v798, %v801
    %v804 = vmul.f32 %v786, %v601
    %v805 = vadd.f32 %v803, %v804
    %807 = vrot.lane.b32.xlu0 %v805, 96
    %v808 = vpop.permute.xlu0 %807
    %810 = vst.msk [vmem:[%s401 + $0xa] sm:$0x3] %vm303, %v808
    %v811 = vld [vmem:[#allocation2 + $0x6] sm:$0x3]
    %v812 = vpack.c.bf16 %v703, %v703
    %v813 = vld [vmem:[#allocation9] sm:$0xf]
    %v814 = vld [vmem:[#allocation9 + $0x4] sm:$0xf]
    %v815 = vld [vmem:[#allocation9 + $0x8] sm:$0xf]
    %v816 = vld [vmem:[#allocation9 + $0xc] sm:$0xf]
    %v817 = vld [vmem:[%s4] sm:$0x1]
    %v819 = vlaneseq
    %v820 = vshrl.u32 %v819, 7
    %v821 = vsub.s32 0, %v820
    %v822 = vrot.slane %v817, %v821
    %825 = vrot.lane.b32.xlu0 %v812, 96
    %v826 = vpop.permute.xlu0 %825
    %v831 = vunpack.c.l.b16 %v813
    %v832 = vunpack.c.l.b16 %v814
    %v833 = vunpack.c.l.b16 %v815
    %v834 = vunpack.c.l.b16 %v816
    %v835 = vpack.c.b16 %v832, %v831
    %v836 = vpack.c.b16 %v834, %v833
    %v840 = vsel %vm89, %v826, 0
    %842 = vmatprep.subr.bf16.mxu0 0
    %843 = vmatpush1.bf16.msra.mxu0 %v835
    %844 = vmatprep.subr.bf16.mxu0 0
    %845 = vmatpush1.bf16.msra.mxu0 %v836
    %846 = vmatprep.subr.bf16.mxu0 0
    %847 = vmatpush1.bf16.msra.mxu0 0
    %848 = vmatprep.subr.bf16.mxu0 0
    %849 = vmatpush1.bf16.msra.mxu0 0
    %850 = vmatprep.subr.bf16.mxu0 0
    %851 = vmatpush1.bf16.msra.mxu0 0
    %852 = vmatprep.subr.bf16.mxu0 0
    %853 = vmatpush1.bf16.msra.mxu0 0
    %854 = vmatprep.subr.bf16.mxu0 0
    %855 = vmatpush1.bf16.msra.mxu0 0
    %856 = vmatprep.subr.bf16.mxu0 0
    %857 = vmatpush1.bf16.msra.mxu0 0
    %858 = vmatprep.subr.bf16.mxu0 0
    %859 = vmatpush1.bf16.msra.mxu0 0
    %860 = vmatprep.subr.bf16.mxu0 0
    %861 = vmatpush1.bf16.msra.mxu0 0
    %862 = vmatprep.subr.bf16.mxu0 0
    %863 = vmatpush1.bf16.msra.mxu0 0
    %864 = vmatprep.subr.bf16.mxu0 0
    %865 = vmatpush1.bf16.msra.mxu0 0
    %866 = vmatprep.subr.bf16.mxu0 0
    %867 = vmatpush1.bf16.msra.mxu0 0
    %868 = vmatprep.subr.bf16.mxu0 0
    %869 = vmatpush1.bf16.msra.mxu0 0
    %870 = vmatprep.subr.bf16.mxu0 0
    %871 = vmatpush1.bf16.msra.mxu0 0
    %872 = vmatprep.subr.bf16.mxu0 0
    %873 = vmatpush1.bf16.msra.mxu0 0
    %874 = vmatprep.mubr.bf16.mxu0 0
    %875 = vmatmul.mubr.bf16.gmra.mrb[0].mxu0 %v840
    %v876 = vpop.f32.mrb[0].mxu0
    %v877 = vadd.f32 %v822, %v876
    %v878 = vpop.f32.mrb[0].mxu0
    %v879 = vpop.f32.mrb[0].mxu0
    %v880 = vpop.f32.mrb[0].mxu0
    %881 = vdwg.mxu0
    %v882 = vadd.f32 %v811, %v877
    %v883 = vxor.u32 %v882, 2147483648
    %v884 = vmul.f32 %v883, 1.442695
    %v885 = vpow.pop %v884
    %v886 = vadd.f32 %v885, 1.0
    %v887 = vrcp.pop %v886
    %v888 = vmul.f32 1.0, %v887
    %890 = vrot.lane.b32.xlu0 %v877, 64
    %v891 = vpop.permute.xlu0 %890
    %v893 = vmul.f32 %v888, %v891
    %895 = vrot.lane.b32.xlu0 %v893, 64
    %v896 = vpop.permute.xlu0 %895
    %v898 = vadd.f32 %v811, %v896
    %v899 = vtanh.pop %v898
    %v900 = vsub.f32 1.0, %v888
    %902 = vrot.lane.b32.xlu0 %v899, 96
    %v903 = vpop.permute.xlu0 %902
    %v905 = vmul.f32 %v900, %v903
    %v906 = vmul.f32 %v888, %v703
    %v907 = vadd.f32 %v905, %v906
    %909 = vrot.lane.b32.xlu0 %v907, 96
    %v910 = vpop.permute.xlu0 %909
    %912 = vst.msk [vmem:[#allocation3 + $0x6] sm:$0x3] %vm303, %v910
    %v913 = vld [vmem:[%s203 + $0x8] sm:$0x3]
    %v914 = vpack.c.bf16 %v805, %v805
    %v915 = vld [vmem:[%s306] sm:$0xf]
    %v916 = vld [vmem:[%s306 + $0x4] sm:$0xf]
    %v917 = vld [vmem:[%s306 + $0x8] sm:$0xf]
    %v918 = vld [vmem:[%s306 + $0xc] sm:$0xf]
    %v919 = vld [vmem:[%s311] sm:$0x1]
    %v921 = vlaneseq
    %v922 = vshrl.u32 %v921, 7
    %v923 = vsub.s32 0, %v922
    %v924 = vrot.slane %v919, %v923
    %927 = vrot.lane.b32.xlu0 %v914, 96
    %v928 = vpop.permute.xlu0 %927
    %v933 = vunpack.c.l.b16 %v915
    %v934 = vunpack.c.l.b16 %v916
    %v935 = vunpack.c.l.b16 %v917
    %v936 = vunpack.c.l.b16 %v918
    %v937 = vpack.c.b16 %v934, %v933
    %v938 = vpack.c.b16 %v936, %v935
    %v942 = vsel %vm89, %v928, 0
    %944 = vmatprep.subr.bf16.mxu0 0
    %945 = vmatpush1.bf16.msra.mxu0 %v937
    %946 = vmatprep.subr.bf16.mxu0 0
    %947 = vmatpush1.bf16.msra.mxu0 %v938
    %948 = vmatprep.subr.bf16.mxu0 0
    %949 = vmatpush1.bf16.msra.mxu0 0
    %950 = vmatprep.subr.bf16.mxu0 0
    %951 = vmatpush1.bf16.msra.mxu0 0
    %952 = vmatprep.subr.bf16.mxu0 0
    %953 = vmatpush1.bf16.msra.mxu0 0
    %954 = vmatprep.subr.bf16.mxu0 0
    %955 = vmatpush1.bf16.msra.mxu0 0
    %956 = vmatprep.subr.bf16.mxu0 0
    %957 = vmatpush1.bf16.msra.mxu0 0
    %958 = vmatprep.subr.bf16.mxu0 0
    %959 = vmatpush1.bf16.msra.mxu0 0
    %960 = vmatprep.subr.bf16.mxu0 0
    %961 = vmatpush1.bf16.msra.mxu0 0
    %962 = vmatprep.subr.bf16.mxu0 0
    %963 = vmatpush1.bf16.msra.mxu0 0
    %964 = vmatprep.subr.bf16.mxu0 0
    %965 = vmatpush1.bf16.msra.mxu0 0
    %966 = vmatprep.subr.bf16.mxu0 0
    %967 = vmatpush1.bf16.msra.mxu0 0
    %968 = vmatprep.subr.bf16.mxu0 0
    %969 = vmatpush1.bf16.msra.mxu0 0
    %970 = vmatprep.subr.bf16.mxu0 0
    %971 = vmatpush1.bf16.msra.mxu0 0
    %972 = vmatprep.subr.bf16.mxu0 0
    %973 = vmatpush1.bf16.msra.mxu0 0
    %974 = vmatprep.subr.bf16.mxu0 0
    %975 = vmatpush1.bf16.msra.mxu0 0
    %976 = vmatprep.mubr.bf16.mxu0 0
    %977 = vmatmul.mubr.bf16.gmra.mrb[0].mxu0 %v942
    %v978 = vpop.f32.mrb[0].mxu0
    %v979 = vadd.f32 %v924, %v978
    %v980 = vpop.f32.mrb[0].mxu0
    %v981 = vpop.f32.mrb[0].mxu0
    %v982 = vpop.f32.mrb[0].mxu0
    %983 = vdwg.mxu0
    %v984 = vadd.f32 %v913, %v979
    %v985 = vxor.u32 %v984, 2147483648
    %v986 = vmul.f32 %v985, 1.442695
    %v987 = vpow.pop %v986
    %v988 = vadd.f32 %v987, 1.0
    %v989 = vrcp.pop %v988
    %v990 = vmul.f32 1.0, %v989
    %992 = vrot.lane.b32.xlu0 %v979, 64
    %v993 = vpop.permute.xlu0 %992
    %v995 = vmul.f32 %v990, %v993
    %997 = vrot.lane.b32.xlu0 %v995, 64
    %v998 = vpop.permute.xlu0 %997
    %v1000 = vadd.f32 %v913, %v998
    %v1001 = vtanh.pop %v1000
    %v1002 = vsub.f32 1.0, %v990
    %1004 = vrot.lane.b32.xlu0 %v1001, 96
    %v1005 = vpop.permute.xlu0 %1004
    %v1007 = vmul.f32 %v1002, %v1005
    %v1008 = vmul.f32 %v990, %v805
    %v1009 = vadd.f32 %v1007, %v1008
    %1011 = vrot.lane.b32.xlu0 %v1009, 96
    %v1012 = vpop.permute.xlu0 %1011
    %1014 = vst.msk [vmem:[%s401 + $0x8] sm:$0x3] %vm303, %v1012
    %v1015 = vld [vmem:[#allocation2 + $0x8] sm:$0x3]
    %v1016 = vpack.c.bf16 %v907, %v907
    %v1017 = vld [vmem:[#allocation9] sm:$0xf]
    %v1018 = vld [vmem:[#allocation9 + $0x4] sm:$0xf]
    %v1019 = vld [vmem:[#allocation9 + $0x8] sm:$0xf]
    %v1020 = vld [vmem:[#allocation9 + $0xc] sm:$0xf]
    %v1021 = vld [vmem:[%s4] sm:$0x1]
    %v1023 = vlaneseq
    %v1024 = vshrl.u32 %v1023, 7
    %v1025 = vsub.s32 0, %v1024
    %v1026 = vrot.slane %v1021, %v1025
    %1029 = vrot.lane.b32.xlu0 %v1016, 96
    %v1030 = vpop.permute.xlu0 %1029
    %v1035 = vunpack.c.l.b16 %v1017
    %v1036 = vunpack.c.l.b16 %v1018
    %v1037 = vunpack.c.l.b16 %v1019
    %v1038 = vunpack.c.l.b16 %v1020
    %v1039 = vpack.c.b16 %v1036, %v1035
    %v1040 = vpack.c.b16 %v1038, %v1037
    %v1044 = vsel %vm89, %v1030, 0
    %1046 = vmatprep.subr.bf16.mxu0 0
    %1047 = vmatpush1.bf16.msra.mxu0 %v1039
    %1048 = vmatprep.subr.bf16.mxu0 0
    %1049 = vmatpush1.bf16.msra.mxu0 %v1040
    %1050 = vmatprep.subr.bf16.mxu0 0
    %1051 = vmatpush1.bf16.msra.mxu0 0
    %1052 = vmatprep.subr.bf16.mxu0 0
    %1053 = vmatpush1.bf16.msra.mxu0 0
    %1054 = vmatprep.subr.bf16.mxu0 0
    %1055 = vmatpush1.bf16.msra.mxu0 0
    %1056 = vmatprep.subr.bf16.mxu0 0
    %1057 = vmatpush1.bf16.msra.mxu0 0
    %1058 = vmatprep.subr.bf16.mxu0 0
    %1059 = vmatpush1.bf16.msra.mxu0 0
    %1060 = vmatprep.subr.bf16.mxu0 0
    %1061 = vmatpush1.bf16.msra.mxu0 0
    %1062 = vmatprep.subr.bf16.mxu0 0
    %1063 = vmatpush1.bf16.msra.mxu0 0
    %1064 = vmatprep.subr.bf16.mxu0 0
    %1065 = vmatpush1.bf16.msra.mxu0 0
    %1066 = vmatprep.subr.bf16.mxu0 0
    %1067 = vmatpush1.bf16.msra.mxu0 0
    %1068 = vmatprep.subr.bf16.mxu0 0
    %1069 = vmatpush1.bf16.msra.mxu0 0
    %1070 = vmatprep.subr.bf16.mxu0 0
    %1071 = vmatpush1.bf16.msra.mxu0 0
    %1072 = vmatprep.subr.bf16.mxu0 0
    %1073 = vmatpush1.bf16.msra.mxu0 0
    %1074 = vmatprep.subr.bf16.mxu0 0
    %1075 = vmatpush1.bf16.msra.mxu0 0
    %1076 = vmatprep.subr.bf16.mxu0 0
    %1077 = vmatpush1.bf16.msra.mxu0 0
    %1078 = vmatprep.mubr.bf16.mxu0 0
    %1079 = vmatmul.mubr.bf16.gmra.mrb[0].mxu0 %v1044
    %v1080 = vpop.f32.mrb[0].mxu0
    %v1081 = vadd.f32 %v1026, %v1080
    %v1082 = vpop.f32.mrb[0].mxu0
    %v1083 = vpop.f32.mrb[0].mxu0
    %v1084 = vpop.f32.mrb[0].mxu0
    %1085 = vdwg.mxu0
    %v1086 = vadd.f32 %v1015, %v1081
    %v1087 = vxor.u32 %v1086, 2147483648
    %v1088 = vmul.f32 %v1087, 1.442695
    %v1089 = vpow.pop %v1088
    %v1090 = vadd.f32 %v1089, 1.0
    %v1091 = vrcp.pop %v1090
    %v1092 = vmul.f32 1.0, %v1091
    %1094 = vrot.lane.b32.xlu0 %v1081, 64
    %v1095 = vpop.permute.xlu0 %1094
    %v1097 = vmul.f32 %v1092, %v1095
    %1099 = vrot.lane.b32.xlu0 %v1097, 64
    %v1100 = vpop.permute.xlu0 %1099
    %v1102 = vadd.f32 %v1015, %v1100
    %v1103 = vtanh.pop %v1102
    %v1104 = vsub.f32 1.0, %v1092
    %1106 = vrot.lane.b32.xlu0 %v1103, 96
    %v1107 = vpop.permute.xlu0 %1106
    %v1109 = vmul.f32 %v1104, %v1107
    %v1110 = vmul.f32 %v1092, %v907
    %v1111 = vadd.f32 %v1109, %v1110
    %1113 = vrot.lane.b32.xlu0 %v1111, 96
    %v1114 = vpop.permute.xlu0 %1113
    %1116 = vst.msk [vmem:[#allocation3 + $0x8] sm:$0x3] %vm303, %v1114
    %v1117 = vld [vmem:[%s203 + $0x6] sm:$0x3]
    %v1118 = vpack.c.bf16 %v1009, %v1009
    %v1119 = vld [vmem:[%s306] sm:$0xf]
    %v1120 = vld [vmem:[%s306 + $0x4] sm:$0xf]
    %v1121 = vld [vmem:[%s306 + $0x8] sm:$0xf]
    %v1122 = vld [vmem:[%s306 + $0xc] sm:$0xf]
    %v1123 = vld [vmem:[%s311] sm:$0x1]
    %v1125 = vlaneseq
    %v1126 = vshrl.u32 %v1125, 7
    %v1127 = vsub.s32 0, %v1126
    %v1128 = vrot.slane %v1123, %v1127
    %1131 = vrot.lane.b32.xlu0 %v1118, 96
    %v1132 = vpop.permute.xlu0 %1131
    %v1137 = vunpack.c.l.b16 %v1119
    %v1138 = vunpack.c.l.b16 %v1120
    %v1139 = vunpack.c.l.b16 %v1121
    %v1140 = vunpack.c.l.b16 %v1122
    %v1141 = vpack.c.b16 %v1138, %v1137
    %v1142 = vpack.c.b16 %v1140, %v1139
    %v1146 = vsel %vm89, %v1132, 0
    %1148 = vmatprep.subr.bf16.mxu0 0
    %1149 = vmatpush1.bf16.msra.mxu0 %v1141
    %1150 = vmatprep.subr.bf16.mxu0 0
    %1151 = vmatpush1.bf16.msra.mxu0 %v1142
    %1152 = vmatprep.subr.bf16.mxu0 0
    %1153 = vmatpush1.bf16.msra.mxu0 0
    %1154 = vmatprep.subr.bf16.mxu0 0
    %1155 = vmatpush1.bf16.msra.mxu0 0
    %1156 = vmatprep.subr.bf16.mxu0 0
    %1157 = vmatpush1.bf16.msra.mxu0 0
    %1158 = vmatprep.subr.bf16.mxu0 0
    %1159 = vmatpush1.bf16.msra.mxu0 0
    %1160 = vmatprep.subr.bf16.mxu0 0
    %1161 = vmatpush1.bf16.msra.mxu0 0
    %1162 = vmatprep.subr.bf16.mxu0 0
    %1163 = vmatpush1.bf16.msra.mxu0 0
    %1164 = vmatprep.subr.bf16.mxu0 0
    %1165 = vmatpush1.bf16.msra.mxu0 0
    %1166 = vmatprep.subr.bf16.mxu0 0
    %1167 = vmatpush1.bf16.msra.mxu0 0
    %1168 = vmatprep.subr.bf16.mxu0 0
    %1169 = vmatpush1.bf16.msra.mxu0 0
    %1170 = vmatprep.subr.bf16.mxu0 0
    %1171 = vmatpush1.bf16.msra.mxu0 0
    %1172 = vmatprep.subr.bf16.mxu0 0
    %1173 = vmatpush1.bf16.msra.mxu0 0
    %1174 = vmatprep.subr.bf16.mxu0 0
    %1175 = vmatpush1.bf16.msra.mxu0 0
    %1176 = vmatprep.subr.bf16.mxu0 0
    %1177 = vmatpush1.bf16.msra.mxu0 0
    %1178 = vmatprep.subr.bf16.mxu0 0
    %1179 = vmatpush1.bf16.msra.mxu0 0
    %1180 = vmatprep.mubr.bf16.mxu0 0
    %1181 = vmatmul.mubr.bf16.gmra.mrb[0].mxu0 %v1146
    %v1182 = vpop.f32.mrb[0].mxu0
    %v1183 = vadd.f32 %v1128, %v1182
    %v1184 = vpop.f32.mrb[0].mxu0
    %v1185 = vpop.f32.mrb[0].mxu0
    %v1186 = vpop.f32.mrb[0].mxu0
    %1187 = vdwg.mxu0
    %v1188 = vadd.f32 %v1117, %v1183
    %v1189 = vxor.u32 %v1188, 2147483648
    %v1190 = vmul.f32 %v1189, 1.442695
    %v1191 = vpow.pop %v1190
    %v1192 = vadd.f32 %v1191, 1.0
    %v1193 = vrcp.pop %v1192
    %v1194 = vmul.f32 1.0, %v1193
    %1196 = vrot.lane.b32.xlu0 %v1183, 64
    %v1197 = vpop.permute.xlu0 %1196
    %v1199 = vmul.f32 %v1194, %v1197
    %1201 = vrot.lane.b32.xlu0 %v1199, 64
    %v1202 = vpop.permute.xlu0 %1201
    %v1204 = vadd.f32 %v1117, %v1202
    %v1205 = vtanh.pop %v1204
    %v1206 = vsub.f32 1.0, %v1194
    %1208 = vrot.lane.b32.xlu0 %v1205, 96
    %v1209 = vpop.permute.xlu0 %1208
    %v1211 = vmul.f32 %v1206, %v1209
    %v1212 = vmul.f32 %v1194, %v1009
    %v1213 = vadd.f32 %v1211, %v1212
    %1215 = vrot.lane.b32.xlu0 %v1213, 96
    %v1216 = vpop.permute.xlu0 %1215
    %1218 = vst.msk [vmem:[%s401 + $0x6] sm:$0x3] %vm303, %v1216
    %v1219 = vld [vmem:[#allocation2 + $0xa] sm:$0x3]
    %v1220 = vpack.c.bf16 %v1111, %v1111
    %v1221 = vld [vmem:[#allocation9] sm:$0xf]
    %v1222 = vld [vmem:[#allocation9 + $0x4] sm:$0xf]
    %v1223 = vld [vmem:[#allocation9 + $0x8] sm:$0xf]
    %v1224 = vld [vmem:[#allocation9 + $0xc] sm:$0xf]
    %v1225 = vld [vmem:[%s4] sm:$0x1]
    %v1227 = vlaneseq
    %v1228 = vshrl.u32 %v1227, 7
    %v1229 = vsub.s32 0, %v1228
    %v1230 = vrot.slane %v1225, %v1229
    %1233 = vrot.lane.b32.xlu0 %v1220, 96
    %v1234 = vpop.permute.xlu0 %1233
    %v1239 = vunpack.c.l.b16 %v1221
    %v1240 = vunpack.c.l.b16 %v1222
    %v1241 = vunpack.c.l.b16 %v1223
    %v1242 = vunpack.c.l.b16 %v1224
    %v1243 = vpack.c.b16 %v1240, %v1239
    %v1244 = vpack.c.b16 %v1242, %v1241
    %v1248 = vsel %vm89, %v1234, 0
    %1250 = vmatprep.subr.bf16.mxu0 0
    %1251 = vmatpush1.bf16.msra.mxu0 %v1243
    %1252 = vmatprep.subr.bf16.mxu0 0
    %1253 = vmatpush1.bf16.msra.mxu0 %v1244
    %1254 = vmatprep.subr.bf16.mxu0 0
    %1255 = vmatpush1.bf16.msra.mxu0 0
    %1256 = vmatprep.subr.bf16.mxu0 0
    %1257 = vmatpush1.bf16.msra.mxu0 0
    %1258 = vmatprep.subr.bf16.mxu0 0
    %1259 = vmatpush1.bf16.msra.mxu0 0
    %1260 = vmatprep.subr.bf16.mxu0 0
    %1261 = vmatpush1.bf16.msra.mxu0 0
    %1262 = vmatprep.subr.bf16.mxu0 0
    %1263 = vmatpush1.bf16.msra.mxu0 0
    %1264 = vmatprep.subr.bf16.mxu0 0
    %1265 = vmatpush1.bf16.msra.mxu0 0
    %1266 = vmatprep.subr.bf16.mxu0 0
    %1267 = vmatpush1.bf16.msra.mxu0 0
    %1268 = vmatprep.subr.bf16.mxu0 0
    %1269 = vmatpush1.bf16.msra.mxu0 0
    %1270 = vmatprep.subr.bf16.mxu0 0
    %1271 = vmatpush1.bf16.msra.mxu0 0
    %1272 = vmatprep.subr.bf16.mxu0 0
    %1273 = vmatpush1.bf16.msra.mxu0 0
    %1274 = vmatprep.subr.bf16.mxu0 0
    %1275 = vmatpush1.bf16.msra.mxu0 0
    %1276 = vmatprep.subr.bf16.mxu0 0
    %1277 = vmatpush1.bf16.msra.mxu0 0
    %1278 = vmatprep.subr.bf16.mxu0 0
    %1279 = vmatpush1.bf16.msra.mxu0 0
    %1280 = vmatprep.subr.bf16.mxu0 0
    %1281 = vmatpush1.bf16.msra.mxu0 0
    %1282 = vmatprep.mubr.bf16.mxu0 0
    %1283 = vmatmul.mubr.bf16.gmra.mrb[0].mxu0 %v1248
    %v1284 = vpop.f32.mrb[0].mxu0
    %v1285 = vadd.f32 %v1230, %v1284
    %v1286 = vpop.f32.mrb[0].mxu0
    %v1287 = vpop.f32.mrb[0].mxu0
    %v1288 = vpop.f32.mrb[0].mxu0
    %1289 = vdwg.mxu0
    %v1290 = vadd.f32 %v1219, %v1285
    %v1291 = vxor.u32 %v1290, 2147483648
    %v1292 = vmul.f32 %v1291, 1.442695
    %v1293 = vpow.pop %v1292
    %v1294 = vadd.f32 %v1293, 1.0
    %v1295 = vrcp.pop %v1294
    %v1296 = vmul.f32 1.0, %v1295
    %1298 = vrot.lane.b32.xlu0 %v1285, 64
    %v1299 = vpop.permute.xlu0 %1298
    %v1301 = vmul.f32 %v1296, %v1299
    %1303 = vrot.lane.b32.xlu0 %v1301, 64
    %v1304 = vpop.permute.xlu0 %1303
    %v1306 = vadd.f32 %v1219, %v1304
    %v1307 = vtanh.pop %v1306
    %v1308 = vsub.f32 1.0, %v1296
    %1310 = vrot.lane.b32.xlu0 %v1307, 96
    %v1311 = vpop.permute.xlu0 %1310
    %v1313 = vmul.f32 %v1308, %v1311
    %v1314 = vmul.f32 %v1296, %v1111
    %v1315 = vadd.f32 %v1313, %v1314
    %1317 = vrot.lane.b32.xlu0 %v1315, 96
    %v1318 = vpop.permute.xlu0 %1317
    %1320 = vst.msk [vmem:[#allocation3 + $0xa] sm:$0x3] %vm303, %v1318
    %v1321 = vld [vmem:[%s203 + $0x4] sm:$0x3]
    %v1322 = vpack.c.bf16 %v1213, %v1213
    %v1323 = vld [vmem:[%s306] sm:$0xf]
    %v1324 = vld [vmem:[%s306 + $0x4] sm:$0xf]
    %v1325 = vld [vmem:[%s306 + $0x8] sm:$0xf]
    %v1326 = vld [vmem:[%s306 + $0xc] sm:$0xf]
    %v1327 = vld [vmem:[%s311] sm:$0x1]
    %v1329 = vlaneseq
    %v1330 = vshrl.u32 %v1329, 7
    %v1331 = vsub.s32 0, %v1330
    %v1332 = vrot.slane %v1327, %v1331
    %1335 = vrot.lane.b32.xlu0 %v1322, 96
    %v1336 = vpop.permute.xlu0 %1335
    %v1341 = vunpack.c.l.b16 %v1323
    %v1342 = vunpack.c.l.b16 %v1324
    %v1343 = vunpack.c.l.b16 %v1325
    %v1344 = vunpack.c.l.b16 %v1326
    %v1345 = vpack.c.b16 %v1342, %v1341
    %v1346 = vpack.c.b16 %v1344, %v1343
    %v1350 = vsel %vm89, %v1336, 0
    %1352 = vmatprep.subr.bf16.mxu0 0
    %1353 = vmatpush1.bf16.msra.mxu0 %v1345
    %1354 = vmatprep.subr.bf16.mxu0 0
    %1355 = vmatpush1.bf16.msra.mxu0 %v1346
    %1356 = vmatprep.subr.bf16.mxu0 0
    %1357 = vmatpush1.bf16.msra.mxu0 0
    %1358 = vmatprep.subr.bf16.mxu0 0
    %1359 = vmatpush1.bf16.msra.mxu0 0
    %1360 = vmatprep.subr.bf16.mxu0 0
    %1361 = vmatpush1.bf16.msra.mxu0 0
    %1362 = vmatprep.subr.bf16.mxu0 0
    %1363 = vmatpush1.bf16.msra.mxu0 0
    %1364 = vmatprep.subr.bf16.mxu0 0
    %1365 = vmatpush1.bf16.msra.mxu0 0
    %1366 = vmatprep.subr.bf16.mxu0 0
    %1367 = vmatpush1.bf16.msra.mxu0 0
    %1368 = vmatprep.subr.bf16.mxu0 0
    %1369 = vmatpush1.bf16.msra.mxu0 0
    %1370 = vmatprep.subr.bf16.mxu0 0
    %1371 = vmatpush1.bf16.msra.mxu0 0
    %1372 = vmatprep.subr.bf16.mxu0 0
    %1373 = vmatpush1.bf16.msra.mxu0 0
    %1374 = vmatprep.subr.bf16.mxu0 0
    %1375 = vmatpush1.bf16.msra.mxu0 0
    %1376 = vmatprep.subr.bf16.mxu0 0
    %1377 = vmatpush1.bf16.msra.mxu0 0
    %1378 = vmatprep.subr.bf16.mxu0 0
    %1379 = vmatpush1.bf16.msra.mxu0 0
    %1380 = vmatprep.subr.bf16.mxu0 0
    %1381 = vmatpush1.bf16.msra.mxu0 0
    %1382 = vmatprep.subr.bf16.mxu0 0
    %1383 = vmatpush1.bf16.msra.mxu0 0
    %1384 = vmatprep.mubr.bf16.mxu0 0
    %1385 = vmatmul.mubr.bf16.gmra.mrb[0].mxu0 %v1350
    %v1386 = vpop.f32.mrb[0].mxu0
    %v1387 = vadd.f32 %v1332, %v1386
    %v1388 = vpop.f32.mrb[0].mxu0
    %v1389 = vpop.f32.mrb[0].mxu0
    %v1390 = vpop.f32.mrb[0].mxu0
    %1391 = vdwg.mxu0
    %v1392 = vadd.f32 %v1321, %v1387
    %v1393 = vxor.u32 %v1392, 2147483648
    %v1394 = vmul.f32 %v1393, 1.442695
    %v1395 = vpow.pop %v1394
    %v1396 = vadd.f32 %v1395, 1.0
    %v1397 = vrcp.pop %v1396
    %v1398 = vmul.f32 1.0, %v1397
    %1400 = vrot.lane.b32.xlu0 %v1387, 64
    %v1401 = vpop.permute.xlu0 %1400
    %v1403 = vmul.f32 %v1398, %v1401
    %1405 = vrot.lane.b32.xlu0 %v1403, 64
    %v1406 = vpop.permute.xlu0 %1405
    %v1408 = vadd.f32 %v1321, %v1406
    %v1409 = vtanh.pop %v1408
    %v1410 = vsub.f32 1.0, %v1398
    %1412 = vrot.lane.b32.xlu0 %v1409, 96
    %v1413 = vpop.permute.xlu0 %1412
    %v1415 = vmul.f32 %v1410, %v1413
    %v1416 = vmul.f32 %v1398, %v1213
    %v1417 = vadd.f32 %v1415, %v1416
    %1419 = vrot.lane.b32.xlu0 %v1417, 96
    %v1420 = vpop.permute.xlu0 %1419
    %1422 = vst.msk [vmem:[%s401 + $0x4] sm:$0x3] %vm303, %v1420
    %v1423 = vld [vmem:[#allocation2 + $0xc] sm:$0x3]
    %v1424 = vpack.c.bf16 %v1315, %v1315
    %v1425 = vld [vmem:[#allocation9] sm:$0xf]
    %v1426 = vld [vmem:[#allocation9 + $0x4] sm:$0xf]
    %v1427 = vld [vmem:[#allocation9 + $0x8] sm:$0xf]
    %v1428 = vld [vmem:[#allocation9 + $0xc] sm:$0xf]
    %v1429 = vld [vmem:[%s4] sm:$0x1]
    %v1431 = vlaneseq
    %v1432 = vshrl.u32 %v1431, 7
    %v1433 = vsub.s32 0, %v1432
    %v1434 = vrot.slane %v1429, %v1433
    %1437 = vrot.lane.b32.xlu0 %v1424, 96
    %v1438 = vpop.permute.xlu0 %1437
    %v1443 = vunpack.c.l.b16 %v1425
    %v1444 = vunpack.c.l.b16 %v1426
    %v1445 = vunpack.c.l.b16 %v1427
    %v1446 = vunpack.c.l.b16 %v1428
    %v1447 = vpack.c.b16 %v1444, %v1443
    %v1448 = vpack.c.b16 %v1446, %v1445
    %v1452 = vsel %vm89, %v1438, 0
    %1454 = vmatprep.subr.bf16.mxu0 0
    %1455 = vmatpush1.bf16.msra.mxu0 %v1447
    %1456 = vmatprep.subr.bf16.mxu0 0
    %1457 = vmatpush1.bf16.msra.mxu0 %v1448
    %1458 = vmatprep.subr.bf16.mxu0 0
    %1459 = vmatpush1.bf16.msra.mxu0 0
    %1460 = vmatprep.subr.bf16.mxu0 0
    %1461 = vmatpush1.bf16.msra.mxu0 0
    %1462 = vmatprep.subr.bf16.mxu0 0
    %1463 = vmatpush1.bf16.msra.mxu0 0
    %1464 = vmatprep.subr.bf16.mxu0 0
    %1465 = vmatpush1.bf16.msra.mxu0 0
    %1466 = vmatprep.subr.bf16.mxu0 0
    %1467 = vmatpush1.bf16.msra.mxu0 0
    %1468 = vmatprep.subr.bf16.mxu0 0
    %1469 = vmatpush1.bf16.msra.mxu0 0
    %1470 = vmatprep.subr.bf16.mxu0 0
    %1471 = vmatpush1.bf16.msra.mxu0 0
    %1472 = vmatprep.subr.bf16.mxu0 0
    %1473 = vmatpush1.bf16.msra.mxu0 0
    %1474 = vmatprep.subr.bf16.mxu0 0
    %1475 = vmatpush1.bf16.msra.mxu0 0
    %1476 = vmatprep.subr.bf16.mxu0 0
    %1477 = vmatpush1.bf16.msra.mxu0 0
    %1478 = vmatprep.subr.bf16.mxu0 0
    %1479 = vmatpush1.bf16.msra.mxu0 0
    %1480 = vmatprep.subr.bf16.mxu0 0
    %1481 = vmatpush1.bf16.msra.mxu0 0
    %1482 = vmatprep.subr.bf16.mxu0 0
    %1483 = vmatpush1.bf16.msra.mxu0 0
    %1484 = vmatprep.subr.bf16.mxu0 0
    %1485 = vmatpush1.bf16.msra.mxu0 0
    %1486 = vmatprep.mubr.bf16.mxu0 0
    %1487 = vmatmul.mubr.bf16.gmra.mrb[0].mxu0 %v1452
    %v1488 = vpop.f32.mrb[0].mxu0
    %v1489 = vadd.f32 %v1434, %v1488
    %v1490 = vpop.f32.mrb[0].mxu0
    %v1491 = vpop.f32.mrb[0].mxu0
    %v1492 = vpop.f32.mrb[0].mxu0
    %1493 = vdwg.mxu0
    %v1494 = vadd.f32 %v1423, %v1489
    %v1495 = vxor.u32 %v1494, 2147483648
    %v1496 = vmul.f32 %v1495, 1.442695
    %v1497 = vpow.pop %v1496
    %v1498 = vadd.f32 %v1497, 1.0
    %v1499 = vrcp.pop %v1498
    %v1500 = vmul.f32 1.0, %v1499
    %1502 = vrot.lane.b32.xlu0 %v1489, 64
    %v1503 = vpop.permute.xlu0 %1502
    %v1505 = vmul.f32 %v1500, %v1503
    %1507 = vrot.lane.b32.xlu0 %v1505, 64
    %v1508 = vpop.permute.xlu0 %1507
    %v1510 = vadd.f32 %v1423, %v1508
    %v1511 = vtanh.pop %v1510
    %v1512 = vsub.f32 1.0, %v1500
    %1514 = vrot.lane.b32.xlu0 %v1511, 96
    %v1515 = vpop.permute.xlu0 %1514
    %v1517 = vmul.f32 %v1512, %v1515
    %v1518 = vmul.f32 %v1500, %v1315
    %v1519 = vadd.f32 %v1517, %v1518
    %1521 = vrot.lane.b32.xlu0 %v1519, 96
    %v1522 = vpop.permute.xlu0 %1521
    %1524 = vst.msk [vmem:[#allocation3 + $0xc] sm:$0x3] %vm303, %v1522
    %v1525 = vld [vmem:[%s203 + $0x2] sm:$0x3]
    %v1526 = vpack.c.bf16 %v1417, %v1417
    %v1527 = vld [vmem:[%s306] sm:$0xf]
    %v1528 = vld [vmem:[%s306 + $0x4] sm:$0xf]
    %v1529 = vld [vmem:[%s306 + $0x8] sm:$0xf]
    %v1530 = vld [vmem:[%s306 + $0xc] sm:$0xf]
    %v1531 = vld [vmem:[%s311] sm:$0x1]
    %v1533 = vlaneseq
    %v1534 = vshrl.u32 %v1533, 7
    %v1535 = vsub.s32 0, %v1534
    %v1536 = vrot.slane %v1531, %v1535
    %1539 = vrot.lane.b32.xlu0 %v1526, 96
    %v1540 = vpop.permute.xlu0 %1539
    %v1545 = vunpack.c.l.b16 %v1527
    %v1546 = vunpack.c.l.b16 %v1528
    %v1547 = vunpack.c.l.b16 %v1529
    %v1548 = vunpack.c.l.b16 %v1530
    %v1549 = vpack.c.b16 %v1546, %v1545
    %v1550 = vpack.c.b16 %v1548, %v1547
    %v1554 = vsel %vm89, %v1540, 0
    %1556 = vmatprep.subr.bf16.mxu0 0
    %1557 = vmatpush1.bf16.msra.mxu0 %v1549
    %1558 = vmatprep.subr.bf16.mxu0 0
    %1559 = vmatpush1.bf16.msra.mxu0 %v1550
    %1560 = vmatprep.subr.bf16.mxu0 0
    %1561 = vmatpush1.bf16.msra.mxu0 0
    %1562 = vmatprep.subr.bf16.mxu0 0
    %1563 = vmatpush1.bf16.msra.mxu0 0
    %1564 = vmatprep.subr.bf16.mxu0 0
    %1565 = vmatpush1.bf16.msra.mxu0 0
    %1566 = vmatprep.subr.bf16.mxu0 0
    %1567 = vmatpush1.bf16.msra.mxu0 0
    %1568 = vmatprep.subr.bf16.mxu0 0
    %1569 = vmatpush1.bf16.msra.mxu0 0
    %1570 = vmatprep.subr.bf16.mxu0 0
    %1571 = vmatpush1.bf16.msra.mxu0 0
    %1572 = vmatprep.subr.bf16.mxu0 0
    %1573 = vmatpush1.bf16.msra.mxu0 0
    %1574 = vmatprep.subr.bf16.mxu0 0
    %1575 = vmatpush1.bf16.msra.mxu0 0
    %1576 = vmatprep.subr.bf16.mxu0 0
    %1577 = vmatpush1.bf16.msra.mxu0 0
    %1578 = vmatprep.subr.bf16.mxu0 0
    %1579 = vmatpush1.bf16.msra.mxu0 0
    %1580 = vmatprep.subr.bf16.mxu0 0
    %1581 = vmatpush1.bf16.msra.mxu0 0
    %1582 = vmatprep.subr.bf16.mxu0 0
    %1583 = vmatpush1.bf16.msra.mxu0 0
    %1584 = vmatprep.subr.bf16.mxu0 0
    %1585 = vmatpush1.bf16.msra.mxu0 0
    %1586 = vmatprep.subr.bf16.mxu0 0
    %1587 = vmatpush1.bf16.msra.mxu0 0
    %1588 = vmatprep.mubr.bf16.mxu0 0
    %1589 = vmatmul.mubr.bf16.gmra.mrb[0].mxu0 %v1554
    %v1590 = vpop.f32.mrb[0].mxu0
    %v1591 = vadd.f32 %v1536, %v1590
    %v1592 = vpop.f32.mrb[0].mxu0
    %v1593 = vpop.f32.mrb[0].mxu0
    %v1594 = vpop.f32.mrb[0].mxu0
    %1595 = vdwg.mxu0
    %v1596 = vadd.f32 %v1525, %v1591
    %v1597 = vxor.u32 %v1596, 2147483648
    %v1598 = vmul.f32 %v1597, 1.442695
    %v1599 = vpow.pop %v1598
    %v1600 = vadd.f32 %v1599, 1.0
    %v1601 = vrcp.pop %v1600
    %v1602 = vmul.f32 1.0, %v1601
    %1604 = vrot.lane.b32.xlu0 %v1591, 64
    %v1605 = vpop.permute.xlu0 %1604
    %v1607 = vmul.f32 %v1602, %v1605
    %1609 = vrot.lane.b32.xlu0 %v1607, 64
    %v1610 = vpop.permute.xlu0 %1609
    %v1612 = vadd.f32 %v1525, %v1610
    %v1613 = vtanh.pop %v1612
    %v1614 = vsub.f32 1.0, %v1602
    %1616 = vrot.lane.b32.xlu0 %v1613, 96
    %v1617 = vpop.permute.xlu0 %1616
    %v1619 = vmul.f32 %v1614, %v1617
    %v1620 = vmul.f32 %v1602, %v1417
    %v1621 = vadd.f32 %v1619, %v1620
    %1623 = vrot.lane.b32.xlu0 %v1621, 96
    %v1624 = vpop.permute.xlu0 %1623
    %1626 = vst.msk [vmem:[%s401 + $0x2] sm:$0x3] %vm303, %v1624
    %v1627 = vld [vmem:[#allocation2 + $0xe] sm:$0x3]
    %v1628 = vpack.c.bf16 %v1519, %v1519
    %v1629 = vld [vmem:[#allocation9] sm:$0xf]
    %v1630 = vld [vmem:[#allocation9 + $0x4] sm:$0xf]
    %v1631 = vld [vmem:[#allocation9 + $0x8] sm:$0xf]
    %v1632 = vld [vmem:[#allocation9 + $0xc] sm:$0xf]
    %v1633 = vld [vmem:[%s4] sm:$0x1]
    %v1635 = vlaneseq
    %v1636 = vshrl.u32 %v1635, 7
    %v1637 = vsub.s32 0, %v1636
    %v1638 = vrot.slane %v1633, %v1637
    %1641 = vrot.lane.b32.xlu0 %v1628, 96
    %v1642 = vpop.permute.xlu0 %1641
    %v1647 = vunpack.c.l.b16 %v1629
    %v1648 = vunpack.c.l.b16 %v1630
    %v1649 = vunpack.c.l.b16 %v1631
    %v1650 = vunpack.c.l.b16 %v1632
    %v1651 = vpack.c.b16 %v1648, %v1647
    %v1652 = vpack.c.b16 %v1650, %v1649
    %v1656 = vsel %vm89, %v1642, 0
    %1658 = vmatprep.subr.bf16.mxu0 0
    %1659 = vmatpush1.bf16.msra.mxu0 %v1651
    %1660 = vmatprep.subr.bf16.mxu0 0
    %1661 = vmatpush1.bf16.msra.mxu0 %v1652
    %1662 = vmatprep.subr.bf16.mxu0 0
    %1663 = vmatpush1.bf16.msra.mxu0 0
    %1664 = vmatprep.subr.bf16.mxu0 0
    %1665 = vmatpush1.bf16.msra.mxu0 0
    %1666 = vmatprep.subr.bf16.mxu0 0
    %1667 = vmatpush1.bf16.msra.mxu0 0
    %1668 = vmatprep.subr.bf16.mxu0 0
    %1669 = vmatpush1.bf16.msra.mxu0 0
    %1670 = vmatprep.subr.bf16.mxu0 0
    %1671 = vmatpush1.bf16.msra.mxu0 0
    %1672 = vmatprep.subr.bf16.mxu0 0
    %1673 = vmatpush1.bf16.msra.mxu0 0
    %1674 = vmatprep.subr.bf16.mxu0 0
    %1675 = vmatpush1.bf16.msra.mxu0 0
    %1676 = vmatprep.subr.bf16.mxu0 0
    %1677 = vmatpush1.bf16.msra.mxu0 0
    %1678 = vmatprep.subr.bf16.mxu0 0
    %1679 = vmatpush1.bf16.msra.mxu0 0
    %1680 = vmatprep.subr.bf16.mxu0 0
    %1681 = vmatpush1.bf16.msra.mxu0 0
    %1682 = vmatprep.subr.bf16.mxu0 0
    %1683 = vmatpush1.bf16.msra.mxu0 0
    %1684 = vmatprep.subr.bf16.mxu0 0
    %1685 = vmatpush1.bf16.msra.mxu0 0
    %1686 = vmatprep.subr.bf16.mxu0 0
    %1687 = vmatpush1.bf16.msra.mxu0 0
    %1688 = vmatprep.subr.bf16.mxu0 0
    %1689 = vmatpush1.bf16.msra.mxu0 0
    %1690 = vmatprep.mubr.bf16.mxu0 0
    %1691 = vmatmul.mubr.bf16.gmra.mrb[0].mxu0 %v1656
    %v1692 = vpop.f32.mrb[0].mxu0
    %v1693 = vadd.f32 %v1638, %v1692
    %v1694 = vpop.f32.mrb[0].mxu0
    %v1695 = vpop.f32.mrb[0].mxu0
    %v1696 = vpop.f32.mrb[0].mxu0
    %1697 = vdwg.mxu0
    %v1698 = vadd.f32 %v1627, %v1693
    %v1699 = vxor.u32 %v1698, 2147483648
    %v1700 = vmul.f32 %v1699, 1.442695
    %v1701 = vpow.pop %v1700
    %v1702 = vadd.f32 %v1701, 1.0
    %v1703 = vrcp.pop %v1702
    %v1704 = vmul.f32 1.0, %v1703
    %1706 = vrot.lane.b32.xlu0 %v1693, 64
    %v1707 = vpop.permute.xlu0 %1706
    %v1709 = vmul.f32 %v1704, %v1707
    %1711 = vrot.lane.b32.xlu0 %v1709, 64
    %v1712 = vpop.permute.xlu0 %1711
    %v1714 = vadd.f32 %v1627, %v1712
    %v1715 = vtanh.pop %v1714
    %v1716 = vsub.f32 1.0, %v1704
    %1718 = vrot.lane.b32.xlu0 %v1715, 96
    %v1719 = vpop.permute.xlu0 %1718
    %v1721 = vmul.f32 %v1716, %v1719
    %v1722 = vmul.f32 %v1704, %v1519
    %v1723 = vadd.f32 %v1721, %v1722
    %1725 = vrot.lane.b32.xlu0 %v1723, 96
    %v1726 = vpop.permute.xlu0 %1725
    %1728 = vst.msk [vmem:[#allocation3 + $0xe] sm:$0x3] %vm303, %v1726
    %v1729 = vld [vmem:[%s203] sm:$0x3]
    %v1730 = vpack.c.bf16 %v1621, %v1621
    %v1731 = vld [vmem:[%s306] sm:$0xf]
    %v1732 = vld [vmem:[%s306 + $0x4] sm:$0xf]
    %v1733 = vld [vmem:[%s306 + $0x8] sm:$0xf]
    %v1734 = vld [vmem:[%s306 + $0xc] sm:$0xf]
    %v1735 = vld [vmem:[%s311] sm:$0x1]
    %v1737 = vlaneseq
    %v1738 = vshrl.u32 %v1737, 7
    %v1739 = vsub.s32 0, %v1738
    %v1740 = vrot.slane %v1735, %v1739
    %1743 = vrot.lane.b32.xlu0 %v1730, 96
    %v1744 = vpop.permute.xlu0 %1743
    %v1749 = vunpack.c.l.b16 %v1731
    %v1750 = vunpack.c.l.b16 %v1732
    %v1751 = vunpack.c.l.b16 %v1733
    %v1752 = vunpack.c.l.b16 %v1734
    %v1753 = vpack.c.b16 %v1750, %v1749
    %v1754 = vpack.c.b16 %v1752, %v1751
    %v1758 = vsel %vm89, %v1744, 0
    %1760 = vmatprep.subr.bf16.mxu0 0
    %1761 = vmatpush1.bf16.msra.mxu0 %v1753
    %1762 = vmatprep.subr.bf16.mxu0 0
    %1763 = vmatpush1.bf16.msra.mxu0 %v1754
    %1764 = vmatprep.subr.bf16.mxu0 0
    %1765 = vmatpush1.bf16.msra.mxu0 0
    %1766 = vmatprep.subr.bf16.mxu0 0
    %1767 = vmatpush1.bf16.msra.mxu0 0
    %1768 = vmatprep.subr.bf16.mxu0 0
    %1769 = vmatpush1.bf16.msra.mxu0 0
    %1770 = vmatprep.subr.bf16.mxu0 0
    %1771 = vmatpush1.bf16.msra.mxu0 0
    %1772 = vmatprep.subr.bf16.mxu0 0
    %1773 = vmatpush1.bf16.msra.mxu0 0
    %1774 = vmatprep.subr.bf16.mxu0 0
    %1775 = vmatpush1.bf16.msra.mxu0 0
    %1776 = vmatprep.subr.bf16.mxu0 0
    %1777 = vmatpush1.bf16.msra.mxu0 0
    %1778 = vmatprep.subr.bf16.mxu0 0
    %1779 = vmatpush1.bf16.msra.mxu0 0
    %1780 = vmatprep.subr.bf16.mxu0 0
    %1781 = vmatpush1.bf16.msra.mxu0 0
    %1782 = vmatprep.subr.bf16.mxu0 0
    %1783 = vmatpush1.bf16.msra.mxu0 0
    %1784 = vmatprep.subr.bf16.mxu0 0
    %1785 = vmatpush1.bf16.msra.mxu0 0
    %1786 = vmatprep.subr.bf16.mxu0 0
    %1787 = vmatpush1.bf16.msra.mxu0 0
    %1788 = vmatprep.subr.bf16.mxu0 0
    %1789 = vmatpush1.bf16.msra.mxu0 0
    %1790 = vmatprep.subr.bf16.mxu0 0
    %1791 = vmatpush1.bf16.msra.mxu0 0
    %1792 = vmatprep.mubr.bf16.mxu0 0
    %1793 = vmatmul.mubr.bf16.gmra.mrb[0].mxu0 %v1758
    %v1794 = vpop.f32.mrb[0].mxu0
    %v1795 = vadd.f32 %v1740, %v1794
    %v1796 = vpop.f32.mrb[0].mxu0
    %v1797 = vpop.f32.mrb[0].mxu0
    %v1798 = vpop.f32.mrb[0].mxu0
    %1799 = vdwg.mxu0
    %v1800 = vadd.f32 %v1729, %v1795
    %v1801 = vxor.u32 %v1800, 2147483648
    %v1802 = vmul.f32 %v1801, 1.442695
    %v1803 = vpow.pop %v1802
    %v1804 = vadd.f32 %v1803, 1.0
    %v1805 = vrcp.pop %v1804
    %v1806 = vmul.f32 1.0, %v1805
    %1808 = vrot.lane.b32.xlu0 %v1795, 64
    %v1809 = vpop.permute.xlu0 %1808
    %v1811 = vmul.f32 %v1806, %v1809
    %1813 = vrot.lane.b32.xlu0 %v1811, 64
    %v1814 = vpop.permute.xlu0 %1813
    %v1816 = vadd.f32 %v1729, %v1814
    %v1817 = vtanh.pop %v1816
    %v1818 = vsub.f32 1.0, %v1806
    %1820 = vrot.lane.b32.xlu0 %v1817, 96
    %v1821 = vpop.permute.xlu0 %1820
    %v1823 = vmul.f32 %v1818, %v1821
    %v1824 = vmul.f32 %v1806, %v1621
    %v1825 = vadd.f32 %v1823, %v1824
    %1827 = vrot.lane.b32.xlu0 %v1825, 96
    %v1828 = vpop.permute.xlu0 %1827
    %1830 = vst.msk [vmem:[%s401] sm:$0x3] %vm303, %v1828
    %v1831 = vld [vmem:[#allocation3] sm:$0xff]
    %v1832 = vld [vmem:[#allocation3 + $0x8] sm:$0xff]
    %v1833 = vld [vmem:[%s401] sm:$0xff]
    %v1834 = vld [vmem:[%s401 + $0x8] sm:$0xff]
    %1837 = vrot.lane.b32.xlu0 %v1833, 32
    %v1838 = vpop.permute.xlu0 %1837
    %1839 = vrot.lane.b32.xlu0 %v1834, 32
    %v1840 = vpop.permute.xlu0 %1839
    %v1843 = vsel %vm89, %v1831, %v1838
    %v1844 = vsel %vm89, %v1832, %v1840
    %vm1845 = vcmask 523264
    %1846 = vst.msk [vmem:[#allocation10] sm:$0xff] %vm1845, %v1843
    %1847 = vst.msk [vmem:[#allocation10 + $0x8] sm:$0xff] %vm1845, %v1844
    // Predicated region
    $region34: #{tpu_custom_call.1} parent=1 // pred_check
      _
    $region35: #{tpu_custom_call.1} parent=1 // pred_check_branch
      %1849 = sbr.rel (0) target = $region37
    $region36: #{tpu_custom_call.1} parent=1 // pred_region
      %s1851 = ssub.s32 256, 256
      %1852 = vsyncadd [#allocation6], %s1851
      %s1853 = sshll.u32 [#allocation10], 4
      %s1854 = int_to_ptr.vmem [resolvable:$true] %s1853
      %1859 = dma.vmem_to_hbm [thread:$0]  %s1854, 256, %s5, [#allocation6], 128, 128, 8
    $region37: #{tpu_custom_call.1} parent=1 // pred_fallthru
      _
    // Predicated region
    $region38: #{tpu_custom_call.1} parent=1 // pred_check
      _
    $region39: #{tpu_custom_call.1} parent=1 // pred_check_branch
      %1861 = sbr.rel (0) target = $region41
    $region40: #{tpu_custom_call.1} parent=1 // pred_region
      %1862 = dma.done [#allocation6], 256
    $region41: #{tpu_custom_call.1} parent=1 // pred_fallthru
      _
    %1863 = vsyncpa [#allocation5], 1
    %1864 = vsyncpa [#allocation8], 1
    %1865 = vsyncpa [#allocation6], 1

</llo_original>
